<compile_context>
chip_gen: v7x
topology: tpu7x:2x2x1
jax: 0.10.0
libtpu: 0.0.40
codegen_flags: <defaults>
</compile_context>

<pallas_src>
import jax
import jax.numpy as jnp
from jax import lax
from jax.experimental import pallas as pl
from jax.experimental.pallas import tpu as pltpu

HIDDEN = 64
INPUT = 2
FC1 = 32
OUT = 1
OUT_PAD = 128          # lane-dense output slab width (unmasked vst)


def _round_up(n, m):
    return ((n + m - 1) // m) * m


def _pick_time_block(T, cap=128):
    """Largest divisor of T that is <= cap (keeps per-chunk VMEM bounded)."""
    if T <= cap:
        return T
    for tt in range(cap, 0, -1):
        if T % tt == 0:
            return tt
    return T


def make_lstm_kernel(TT, TB, H=HIDDEN):
    """Kernel factory; TT (time chunk) and TB (batch block) are static."""
    unroll = True if TT <= 16 else 8

    def kernel(x_ref, wih_ref, whh_ref, b_ref, w1_ref, b1_ref, w2_ref, b2_ref,
               o_ref, xproj_ref, h_ref, c_ref):
        # x_ref:    (TT, TB, I)  time-major input chunk, f32
        # wih_ref:  (I, 4H)      input->gates, f32 (used on the VPU)
        # whh_ref:  (H, 4H)      hidden->gates, bf16 (MXU operand)
        # b_ref:    (1, 4H)      b_ih + b_hh, f32
        # w1_ref:   (H, 32) bf16, b1_ref: (1, 32) f32
        # w2_ref:   (1, 32) f32,  b2_ref: (1, 1) f32
        # o_ref:    (TB, OUT_PAD) lane-dense output slab
        # xproj_ref:(TT, TB, 4H) f32 scratch; h_ref/c_ref: (TB, H) f32 scratch
        k = pl.program_id(1)

        @pl.when(k == 0)
        def _init():
            h_ref[...] = jnp.zeros_like(h_ref)
            c_ref[...] = jnp.zeros_like(c_ref)

        # K=2 input projection on the VPU (no MXU launch): two broadcast FMAs
        # over the whole chunk, written to VMEM scratch bounded by TT.
        x = x_ref[...]                                        # (TT, TB, 2)
        wih = wih_ref[...]                                    # (2, 4H)
        xproj_ref[...] = (x[..., 0:1] * wih[0:1, :]
                          + x[..., 1:2] * wih[1:2, :]
                          + b_ref[...])                       # (TT, TB, 4H)

        whh = whh_ref[...]                                    # (H, 4H) bf16

        # Strict serial recurrence: step t+1 consumes h_t, so no cross-step
        # overlap exists; unroll only gives the scheduler visibility.
        def step(t, carry):
            h, c = carry
            # bf16 MXU operands, f32 accumulation; state math stays f32.
            gates = xproj_ref[t] + jnp.dot(
                h.astype(jnp.bfloat16), whh,
                preferred_element_type=jnp.float32)           # (TB, 4H) f32
            # gate columns are [i | f | o | g]: full-width sigmoid, tanh on the
            # tile-aligned [128:256) half.  The 64-lane extracts below are
            # inherent to the H=64 elementwise gate combine.
            sig = jax.nn.sigmoid(gates)
            tnh = jnp.tanh(gates[:, 2 * H:])
            i_g = sig[:, :H]
            f_g = sig[:, H:2 * H]
            o_g = sig[:, 2 * H:3 * H]
            g_g = tnh[:, H:]
            c = f_g * c + i_g * g_g
            h = o_g * jnp.tanh(c)
            return h, c

        h, c = lax.fori_loop(0, TT, step, (h_ref[...], c_ref[...]),
                             unroll=unroll)
        h_ref[...] = h
        c_ref[...] = c

        # fc1 -> ReLU -> fc2 head runs once, on the final time chunk.
        @pl.when(k == pl.num_programs(1) - 1)
        def _head():
            z = jnp.maximum(
                jnp.dot(h.astype(jnp.bfloat16), w1_ref[...],
                        preferred_element_type=jnp.float32) + b1_ref[...],
                0.0)                                          # (TB, 32) f32
            # fc2 has N=1: VPU multiply + lane reduction instead of an MXU op;
            # broadcast to a lane-dense slab so the store is an unmasked vst.
            y = jnp.sum(z * w2_ref[...], axis=-1, keepdims=True) + b2_ref[...]
            o_ref[...] = jnp.broadcast_to(y, o_ref.shape)

    return kernel


def prep_kernel_params(p):
    """PyTorch-shaped params -> kernel layout.

    Gate rows reordered from PyTorch's [i|f|g|o] to [i|f|o|g]; recurrence and
    fc1 weights pre-transposed and cast to bf16 (MXU operands); wih stays f32
    (VPU projection); fc2 kept as an f32 row for the VPU reduction.
    """
    H = HIDDEN

    def reorder(w):  # [i|f|g|o] -> [i|f|o|g] along axis 0 (4H)
        return jnp.concatenate([w[:2 * H], w[3 * H:4 * H], w[2 * H:3 * H]],
                               axis=0)

    w_ih_r = reorder(p["w_ih"])                     # (4H, I)
    w_hh_r = reorder(p["w_hh"])                     # (4H, H)
    b_r = reorder(p["b_ih"] + p["b_hh"])            # (4H,)
    return {
        "w_ih_t": w_ih_r.T,                                   # (I, 4H) f32
        "w_hh_t": w_hh_r.T.astype(jnp.bfloat16),              # (H, 4H) bf16
        "b_gates": b_r.reshape(1, 4 * H),                     # (1, 4H) f32
        "w1_t": p["w1"].T.astype(jnp.bfloat16),               # (H, 32) bf16
        "b1": p["b1"].reshape(1, FC1),
        "w2_row": p["w2"].reshape(1, FC1),                    # (1, 32) f32
        "b2": p["b2"].reshape(1, OUT),
    }


def lstm_model_forward(x, params, *, batch_block=None, time_block=None):
    """x: (B, T, I) float32 (batch_first, like the PyTorch module) -> (B, 1).

    batch_block: rows per grid step (pack/concat requests and use >=128/256 to
    fill the MXU when batch is large; capped at 256).  time_block: time-chunk
    size (must divide T); bounds per-chunk VMEM for long sequences.
    """
    B, T, I = x.shape
    assert I == INPUT
    if batch_block is None:
        batch_block = min(256, _round_up(B, 8))
    TB = _round_up(batch_block, 8)
    if time_block is None:
        time_block = _pick_time_block(T)
    TT = time_block
    assert T % TT == 0, "time_block must divide T"

    B_pad = _round_up(B, TB)
    if B_pad != B:
        x = jnp.concatenate(
            [x, jnp.zeros((B_pad - B, T, I), x.dtype)], axis=0)
    x_tm = jnp.transpose(x, (1, 0, 2))              # (T, B_pad, I) time-major

    kp = prep_kernel_params(params)
    kernel = make_lstm_kernel(TT, TB)
    nB, nT = B_pad // TB, T // TT
    H = HIDDEN

    grid_spec = pltpu.PrefetchScalarGridSpec(
        num_scalar_prefetch=0,
        grid=(nB, nT),
        in_specs=[
            pl.BlockSpec((TT, TB, INPUT), lambda j, k: (k, j, 0)),   # x chunk
            pl.BlockSpec((INPUT, 4 * H), lambda j, k: (0, 0)),       # wih
            pl.BlockSpec((H, 4 * H), lambda j, k: (0, 0)),           # whh bf16
            pl.BlockSpec((1, 4 * H), lambda j, k: (0, 0)),           # b_gates
            pl.BlockSpec((H, FC1), lambda j, k: (0, 0)),             # w1 bf16
            pl.BlockSpec((1, FC1), lambda j, k: (0, 0)),             # b1
            pl.BlockSpec((1, FC1), lambda j, k: (0, 0)),             # w2 row
            pl.BlockSpec((1, OUT), lambda j, k: (0, 0)),             # b2
        ],
        out_specs=pl.BlockSpec((TB, OUT_PAD), lambda j, k: (j, 0)),
        scratch_shapes=[
            pltpu.VMEM((TT, TB, 4 * H), jnp.float32),   # xproj (per chunk)
            pltpu.VMEM((TB, H), jnp.float32),           # h carry
            pltpu.VMEM((TB, H), jnp.float32),           # c carry
        ],
    )

    out = pl.pallas_call(
        kernel,
        out_shape=jax.ShapeDtypeStruct((B_pad, OUT_PAD), jnp.float32),
        grid_spec=grid_spec,
        compiler_params=pltpu.CompilerParams(
            dimension_semantics=("parallel", "arbitrary"),
            vmem_limit_bytes=32 * 1024 * 1024),
    )(
        x_tm,
        kp["w_ih_t"], kp["w_hh_t"], kp["b_gates"],
        kp["w1_t"], kp["b1"], kp["w2_row"], kp["b2"],
    )
    return out[:B, :OUT]


def make_params(key):
    """Deterministic synthetic parameters with the exact PyTorch shapes."""
    ks = jax.random.split(key, 8)
    scale = 1.0 / jnp.sqrt(HIDDEN)
    u = lambda k, shape: jax.random.uniform(k, shape, jnp.float32, -scale, scale)
    return {
        "w_ih": u(ks[0], (4 * HIDDEN, INPUT)),      # weight_ih_l0
        "w_hh": u(ks[1], (4 * HIDDEN, HIDDEN)),     # weight_hh_l0
        "b_ih": u(ks[2], (4 * HIDDEN,)),            # bias_ih_l0
        "b_hh": u(ks[3], (4 * HIDDEN,)),            # bias_hh_l0
        "w1": u(ks[4], (FC1, HIDDEN)),              # fc1.weight
        "b1": u(ks[5], (FC1,)),                     # fc1.bias
        "w2": u(ks[6], (OUT, FC1)),                 # fc2.weight
        "b2": u(ks[7], (OUT,)),                     # fc2.bias
    }


def reference_forward(x, p):
    """Pure-JAX f32 reference mirroring the PyTorch forward (PyTorch gate order)."""
    B, T, I = x.shape
    H = HIDDEN
    w_ih_t = p["w_ih"].T
    w_hh_t = p["w_hh"].T
    b = (p["b_ih"] + p["b_hh"])[None, :]
    h = jnp.zeros((B, H), jnp.float32)
    c = jnp.zeros((B, H), jnp.float32)
    for t in range(T):
        gates = x[:, t, :] @ w_ih_t + h @ w_hh_t + b
        i_g = jax.nn.sigmoid(gates[:, 0:H])
        f_g = jax.nn.sigmoid(gates[:, H:2 * H])
        g_g = jnp.tanh(gates[:, 2 * H:3 * H])
        o_g = jax.nn.sigmoid(gates[:, 3 * H:4 * H])
        c = f_g * c + i_g * g_g
        h = o_g * jnp.tanh(c)
    z = jnp.maximum(h @ p["w1"].T + p["b1"], 0.0)
    return z @ p["w2"].T + p["b2"]


if __name__ == "__main__":
    key = jax.random.PRNGKey(0)
    k_x, k_p, k_x2 = jax.random.split(key, 3)
    params = make_params(k_p)

    # small demo shape: batch=2, seq=8 (single batch block, single time chunk)
    B, T = 2, 8
    x = jax.random.normal(k_x, (B, T, INPUT), jnp.float32)
    out = jax.block_until_ready(lstm_model_forward(x, params))
    ref = reference_forward(x, params)
    assert out.shape == (B, OUT)
    # bf16 MXU operands (f32 accumulation) -> relaxed tolerance vs f32 reference
    assert jnp.allclose(out, ref, atol=2e-2, rtol=2e-2), (out, ref)

    # exercise the batch grid (3 blocks of 8) and time chunking (2 chunks of 4)
    B2 = 24
    x2 = jax.random.normal(k_x2, (B2, T, INPUT), jnp.float32)
    out2 = jax.block_until_ready(
        lstm_model_forward(x2, params, batch_block=8, time_block=4))
    ref2 = reference_forward(x2, params)
    assert out2.shape == (B2, OUT)
    assert jnp.allclose(out2, ref2, atol=2e-2, rtol=2e-2), (out2, ref2)

    print("KERNEL_OK")
</pallas_src>

<mosaic_0001>
module attributes {stable_mosaic.version = 11 : i64} {
  func.func @kernel(%arg0: i32, %arg1: i32, %arg2: memref<8x8x2xf32, #tpu.memory_space<vmem>>, %arg3: memref<2x256xf32, #tpu.memory_space<vmem>>, %arg4: memref<64x256xbf16, #tpu.memory_space<vmem>>, %arg5: memref<1x256xf32, #tpu.memory_space<vmem>>, %arg6: memref<64x32xbf16, #tpu.memory_space<vmem>>, %arg7: memref<1x32xf32, #tpu.memory_space<vmem>>, %arg8: memref<1x32xf32, #tpu.memory_space<vmem>>, %arg9: memref<1x1xf32, #tpu.memory_space<vmem>>, %arg10: memref<8x128xf32, #tpu.memory_space<vmem>>, %arg11: memref<8x8x256xf32, #tpu.memory_space<vmem>>, %arg12: memref<8x64xf32, #tpu.memory_space<vmem>>, %arg13: memref<8x64xf32, #tpu.memory_space<vmem>>) attributes {dimension_semantics = [#tpu.dimension_semantics<parallel>, #tpu.dimension_semantics<arbitrary>], iteration_bounds = array<i64: 1, 1>, scalar_prefetch = 0 : i64, scratch_operands = 3 : i64, tpu.core_type = #tpu.core_type<tc>, window_params = [{transform_indices = @transform_0, window_bounds = array<i64: 8, 8, 2>}, {pipeline_mode = #tpu.pipeline_mode<synchronous>, transform_indices = @transform_1, window_bounds = array<i64: 2, 256>}, {pipeline_mode = #tpu.pipeline_mode<synchronous>, transform_indices = @transform_2, window_bounds = array<i64: 64, 256>}, {pipeline_mode = #tpu.pipeline_mode<synchronous>, transform_indices = @transform_3, window_bounds = array<i64: 1, 256>}, {pipeline_mode = #tpu.pipeline_mode<synchronous>, transform_indices = @transform_4, window_bounds = array<i64: 64, 32>}, {pipeline_mode = #tpu.pipeline_mode<synchronous>, transform_indices = @transform_5, window_bounds = array<i64: 1, 32>}, {pipeline_mode = #tpu.pipeline_mode<synchronous>, transform_indices = @transform_6, window_bounds = array<i64: 1, 32>}, {pipeline_mode = #tpu.pipeline_mode<synchronous>, transform_indices = @transform_7, window_bounds = array<i64: 1, 1>}, {transform_indices = @transform_8, window_bounds = array<i64: 8, 128>}]} {
    %c0_i32 = arith.constant 0 : i32
    %0 = arith.cmpi eq, %arg1, %c0_i32 : i32
    %1 = arith.extui %0 : i1 to i32
    %c0_i32_0 = arith.constant 0 : i32
    %2 = arith.cmpi ne, %1, %c0_i32_0 : i32
    scf.if %2 {
      %cst_54 = arith.constant 0.000000e+00 : f32
      %207 = vector.broadcast %cst_54 : f32 to vector<8x64xf32>
      %c0_55 = arith.constant 0 : index
      %c0_56 = arith.constant 0 : index
      %208 = vector.load %arg12[%c0_55, %c0_56] : memref<8x64xf32, #tpu.memory_space<vmem>>, vector<8x64xf32>
      tpu.vector_store %arg12[%c0_55, %c0_56], %207 {strides = array<i32>} : memref<8x64xf32, #tpu.memory_space<vmem>>, vector<8x64xf32>,
      %cst_57 = arith.constant 0.000000e+00 : f32
      %209 = vector.broadcast %cst_57 : f32 to vector<8x64xf32>
      %c0_58 = arith.constant 0 : index
      %c0_59 = arith.constant 0 : index
      %210 = vector.load %arg13[%c0_58, %c0_59] : memref<8x64xf32, #tpu.memory_space<vmem>>, vector<8x64xf32>
      tpu.vector_store %arg13[%c0_58, %c0_59], %209 {strides = array<i32>} : memref<8x64xf32, #tpu.memory_space<vmem>>, vector<8x64xf32>,
    } else {
    }
    %c0 = arith.constant 0 : index
    %c0_1 = arith.constant 0 : index
    %c0_2 = arith.constant 0 : index
    %3 = vector.load %arg2[%c0, %c0_1, %c0_2] : memref<8x8x2xf32, #tpu.memory_space<vmem>>, vector<8x8x2xf32>
    %c0_3 = arith.constant 0 : index
    %c0_4 = arith.constant 0 : index
    %4 = vector.load %arg3[%c0_3, %c0_4] : memref<2x256xf32, #tpu.memory_space<vmem>>, vector<2x256xf32>
    %5 = vector.extract_strided_slice %3 {offsets = [0, 0, 0], sizes = [8, 8, 1], strides = [1, 1, 1]} : vector<8x8x2xf32> to vector<8x8x1xf32>
    %6 = vector.extract_strided_slice %4 {offsets = [0, 0], sizes = [1, 256], strides = [1, 1]} : vector<2x256xf32> to vector<1x256xf32>
    %7 = vector.shape_cast %6 : vector<1x256xf32> to vector<1x1x256xf32>
    %8 = vector.broadcast %5 : vector<8x8x1xf32> to vector<8x8x256xf32>
    %9 = vector.broadcast %7 : vector<1x1x256xf32> to vector<8x8x256xf32>
    %10 = arith.mulf %8, %9 : vector<8x8x256xf32>
    %11 = vector.extract_strided_slice %3 {offsets = [0, 0, 1], sizes = [8, 8, 1], strides = [1, 1, 1]} : vector<8x8x2xf32> to vector<8x8x1xf32>
    %12 = vector.extract_strided_slice %4 {offsets = [1, 0], sizes = [1, 256], strides = [1, 1]} : vector<2x256xf32> to vector<1x256xf32>
    %13 = vector.shape_cast %12 : vector<1x256xf32> to vector<1x1x256xf32>
    %14 = vector.broadcast %11 : vector<8x8x1xf32> to vector<8x8x256xf32>
    %15 = vector.broadcast %13 : vector<1x1x256xf32> to vector<8x8x256xf32>
    %16 = arith.mulf %14, %15 : vector<8x8x256xf32>
    %17 = arith.addf %10, %16 : vector<8x8x256xf32>
    %c0_5 = arith.constant 0 : index
    %c0_6 = arith.constant 0 : index
    %18 = vector.load %arg5[%c0_5, %c0_6] : memref<1x256xf32, #tpu.memory_space<vmem>>, vector<1x256xf32>
    %19 = vector.shape_cast %18 : vector<1x256xf32> to vector<1x1x256xf32>
    %20 = vector.broadcast %19 : vector<1x1x256xf32> to vector<8x8x256xf32>
    %21 = arith.addf %17, %20 : vector<8x8x256xf32>
    %c0_7 = arith.constant 0 : index
    %c0_8 = arith.constant 0 : index
    %c0_9 = arith.constant 0 : index
    %22 = vector.load %arg11[%c0_7, %c0_8, %c0_9] : memref<8x8x256xf32, #tpu.memory_space<vmem>>, vector<8x8x256xf32>
    tpu.vector_store %arg11[%c0_7, %c0_8, %c0_9], %21 {strides = array<i32>} : memref<8x8x256xf32, #tpu.memory_space<vmem>>, vector<8x8x256xf32>,
    %c0_10 = arith.constant 0 : index
    %c0_11 = arith.constant 0 : index
    %23 = vector.load %arg4[%c0_10, %c0_11] : memref<64x256xbf16, #tpu.memory_space<vmem>>, vector<64x256xbf16>
    %c0_12 = arith.constant 0 : index
    %c0_13 = arith.constant 0 : index
    %24 = vector.load %arg12[%c0_12, %c0_13] : memref<8x64xf32, #tpu.memory_space<vmem>>, vector<8x64xf32>
    %c0_14 = arith.constant 0 : index
    %c0_15 = arith.constant 0 : index
    %25 = vector.load %arg13[%c0_14, %c0_15] : memref<8x64xf32, #tpu.memory_space<vmem>>, vector<8x64xf32>
    %c0_i32_16 = arith.constant 0 : i32
    %26 = arith.index_cast %c0_i32_16 : i32 to index
    %c0_17 = arith.constant 0 : index
    %c0_18 = arith.constant 0 : index
    %27 = vector.load %arg11[%26, %c0_17, %c0_18] : memref<8x8x256xf32, #tpu.memory_space<vmem>>, vector<1x8x256xf32>
    %28 = vector.shape_cast %27 : vector<1x8x256xf32> to vector<8x256xf32>
    %29 = arith.truncf %24 : vector<8x64xf32> to vector<8x64xbf16>
    %cst = arith.constant dense<0.000000e+00> : vector<8x256xf32>
    %30 = tpu.matmul %29, %23, %cst {dimension_numbers = #tpu.dot_dimension_numbers<[1], [0], [0], [1], [0, 0, 1, 1], [], []>} : vector<8x64xbf16>, vector<64x256xbf16>, vector<8x256xf32> -> vector<8x256xf32>
    %31 = arith.addf %28, %30 : vector<8x256xf32>
    %32 = arith.negf %31 : vector<8x256xf32>
    %33 = math.exp %32 : vector<8x256xf32>
    %cst_19 = arith.constant 1.000000e+00 : f32
    %34 = vector.broadcast %cst_19 : f32 to vector<8x256xf32>
    %35 = arith.addf %34, %33 : vector<8x256xf32>
    %36 = arith.divf %34, %35 : vector<8x256xf32>
    %37 = vector.extract_strided_slice %31 {offsets = [0, 128], sizes = [8, 128], strides = [1, 1]} : vector<8x256xf32> to vector<8x128xf32>
    %38 = math.tanh %37 : vector<8x128xf32>
    %39 = vector.extract_strided_slice %36 {offsets = [0, 0], sizes = [8, 64], strides = [1, 1]} : vector<8x256xf32> to vector<8x64xf32>
    %40 = vector.extract_strided_slice %36 {offsets = [0, 64], sizes = [8, 64], strides = [1, 1]} : vector<8x256xf32> to vector<8x64xf32>
    %41 = vector.extract_strided_slice %36 {offsets = [0, 128], sizes = [8, 64], strides = [1, 1]} : vector<8x256xf32> to vector<8x64xf32>
    %42 = vector.extract_strided_slice %38 {offsets = [0, 64], sizes = [8, 64], strides = [1, 1]} : vector<8x128xf32> to vector<8x64xf32>
    %43 = arith.mulf %40, %25 : vector<8x64xf32>
    %44 = arith.mulf %39, %42 : vector<8x64xf32>
    %45 = arith.addf %43, %44 : vector<8x64xf32>
    %46 = math.tanh %45 : vector<8x64xf32>
    %47 = arith.mulf %41, %46 : vector<8x64xf32>
    %c1_i32 = arith.constant 1 : i32
    %48 = arith.index_cast %c1_i32 : i32 to index
    %c0_20 = arith.constant 0 : index
    %c0_21 = arith.constant 0 : index
    %49 = vector.load %arg11[%48, %c0_20, %c0_21] : memref<8x8x256xf32, #tpu.memory_space<vmem>>, vector<1x8x256xf32>
    %50 = vector.shape_cast %49 : vector<1x8x256xf32> to vector<8x256xf32>
    %51 = arith.truncf %47 : vector<8x64xf32> to vector<8x64xbf16>
    %cst_22 = arith.constant dense<0.000000e+00> : vector<8x256xf32>
    %52 = tpu.matmul %51, %23, %cst_22 {dimension_numbers = #tpu.dot_dimension_numbers<[1], [0], [0], [1], [0, 0, 1, 1], [], []>} : vector<8x64xbf16>, vector<64x256xbf16>, vector<8x256xf32> -> vector<8x256xf32>
    %53 = arith.addf %50, %52 : vector<8x256xf32>
    %54 = arith.negf %53 : vector<8x256xf32>
    %55 = math.exp %54 : vector<8x256xf32>
    %cst_23 = arith.constant 1.000000e+00 : f32
    %56 = vector.broadcast %cst_23 : f32 to vector<8x256xf32>
    %57 = arith.addf %56, %55 : vector<8x256xf32>
    %58 = arith.divf %56, %57 : vector<8x256xf32>
    %59 = vector.extract_strided_slice %53 {offsets = [0, 128], sizes = [8, 128], strides = [1, 1]} : vector<8x256xf32> to vector<8x128xf32>
    %60 = math.tanh %59 : vector<8x128xf32>
    %61 = vector.extract_strided_slice %58 {offsets = [0, 0], sizes = [8, 64], strides = [1, 1]} : vector<8x256xf32> to vector<8x64xf32>
    %62 = vector.extract_strided_slice %58 {offsets = [0, 64], sizes = [8, 64], strides = [1, 1]} : vector<8x256xf32> to vector<8x64xf32>
    %63 = vector.extract_strided_slice %58 {offsets = [0, 128], sizes = [8, 64], strides = [1, 1]} : vector<8x256xf32> to vector<8x64xf32>
    %64 = vector.extract_strided_slice %60 {offsets = [0, 64], sizes = [8, 64], strides = [1, 1]} : vector<8x128xf32> to vector<8x64xf32>
    %65 = arith.mulf %62, %45 : vector<8x64xf32>
    %66 = arith.mulf %61, %64 : vector<8x64xf32>
    %67 = arith.addf %65, %66 : vector<8x64xf32>
    %68 = math.tanh %67 : vector<8x64xf32>
    %69 = arith.mulf %63, %68 : vector<8x64xf32>
    %c2_i32 = arith.constant 2 : i32
    %70 = arith.index_cast %c2_i32 : i32 to index
    %c0_24 = arith.constant 0 : index
    %c0_25 = arith.constant 0 : index
    %71 = vector.load %arg11[%70, %c0_24, %c0_25] : memref<8x8x256xf32, #tpu.memory_space<vmem>>, vector<1x8x256xf32>
    %72 = vector.shape_cast %71 : vector<1x8x256xf32> to vector<8x256xf32>
    %73 = arith.truncf %69 : vector<8x64xf32> to vector<8x64xbf16>
    %cst_26 = arith.constant dense<0.000000e+00> : vector<8x256xf32>
    %74 = tpu.matmul %73, %23, %cst_26 {dimension_numbers = #tpu.dot_dimension_numbers<[1], [0], [0], [1], [0, 0, 1, 1], [], []>} : vector<8x64xbf16>, vector<64x256xbf16>, vector<8x256xf32> -> vector<8x256xf32>
    %75 = arith.addf %72, %74 : vector<8x256xf32>
    %76 = arith.negf %75 : vector<8x256xf32>
    %77 = math.exp %76 : vector<8x256xf32>
    %cst_27 = arith.constant 1.000000e+00 : f32
    %78 = vector.broadcast %cst_27 : f32 to vector<8x256xf32>
    %79 = arith.addf %78, %77 : vector<8x256xf32>
    %80 = arith.divf %78, %79 : vector<8x256xf32>
    %81 = vector.extract_strided_slice %75 {offsets = [0, 128], sizes = [8, 128], strides = [1, 1]} : vector<8x256xf32> to vector<8x128xf32>
    %82 = math.tanh %81 : vector<8x128xf32>
    %83 = vector.extract_strided_slice %80 {offsets = [0, 0], sizes = [8, 64], strides = [1, 1]} : vector<8x256xf32> to vector<8x64xf32>
    %84 = vector.extract_strided_slice %80 {offsets = [0, 64], sizes = [8, 64], strides = [1, 1]} : vector<8x256xf32> to vector<8x64xf32>
    %85 = vector.extract_strided_slice %80 {offsets = [0, 128], sizes = [8, 64], strides = [1, 1]} : vector<8x256xf32> to vector<8x64xf32>
    %86 = vector.extract_strided_slice %82 {offsets = [0, 64], sizes = [8, 64], strides = [1, 1]} : vector<8x128xf32> to vector<8x64xf32>
    %87 = arith.mulf %84, %67 : vector<8x64xf32>
    %88 = arith.mulf %83, %86 : vector<8x64xf32>
    %89 = arith.addf %87, %88 : vector<8x64xf32>
    %90 = math.tanh %89 : vector<8x64xf32>
    %91 = arith.mulf %85, %90 : vector<8x64xf32>
    %c3_i32 = arith.constant 3 : i32
    %92 = arith.index_cast %c3_i32 : i32 to index
    %c0_28 = arith.constant 0 : index
    %c0_29 = arith.constant 0 : index
    %93 = vector.load %arg11[%92, %c0_28, %c0_29] : memref<8x8x256xf32, #tpu.memory_space<vmem>>, vector<1x8x256xf32>
    %94 = vector.shape_cast %93 : vector<1x8x256xf32> to vector<8x256xf32>
    %95 = arith.truncf %91 : vector<8x64xf32> to vector<8x64xbf16>
    %cst_30 = arith.constant dense<0.000000e+00> : vector<8x256xf32>
    %96 = tpu.matmul %95, %23, %cst_30 {dimension_numbers = #tpu.dot_dimension_numbers<[1], [0], [0], [1], [0, 0, 1, 1], [], []>} : vector<8x64xbf16>, vector<64x256xbf16>, vector<8x256xf32> -> vector<8x256xf32>
    %97 = arith.addf %94, %96 : vector<8x256xf32>
    %98 = arith.negf %97 : vector<8x256xf32>
    %99 = math.exp %98 : vector<8x256xf32>
    %cst_31 = arith.constant 1.000000e+00 : f32
    %100 = vector.broadcast %cst_31 : f32 to vector<8x256xf32>
    %101 = arith.addf %100, %99 : vector<8x256xf32>
    %102 = arith.divf %100, %101 : vector<8x256xf32>
    %103 = vector.extract_strided_slice %97 {offsets = [0, 128], sizes = [8, 128], strides = [1, 1]} : vector<8x256xf32> to vector<8x128xf32>
    %104 = math.tanh %103 : vector<8x128xf32>
    %105 = vector.extract_strided_slice %102 {offsets = [0, 0], sizes = [8, 64], strides = [1, 1]} : vector<8x256xf32> to vector<8x64xf32>
    %106 = vector.extract_strided_slice %102 {offsets = [0, 64], sizes = [8, 64], strides = [1, 1]} : vector<8x256xf32> to vector<8x64xf32>
    %107 = vector.extract_strided_slice %102 {offsets = [0, 128], sizes = [8, 64], strides = [1, 1]} : vector<8x256xf32> to vector<8x64xf32>
    %108 = vector.extract_strided_slice %104 {offsets = [0, 64], sizes = [8, 64], strides = [1, 1]} : vector<8x128xf32> to vector<8x64xf32>
    %109 = arith.mulf %106, %89 : vector<8x64xf32>
    %110 = arith.mulf %105, %108 : vector<8x64xf32>
    %111 = arith.addf %109, %110 : vector<8x64xf32>
    %112 = math.tanh %111 : vector<8x64xf32>
    %113 = arith.mulf %107, %112 : vector<8x64xf32>
    %c4_i32 = arith.constant 4 : i32
    %114 = arith.index_cast %c4_i32 : i32 to index
    %c0_32 = arith.constant 0 : index
    %c0_33 = arith.constant 0 : index
    %115 = vector.load %arg11[%114, %c0_32, %c0_33] : memref<8x8x256xf32, #tpu.memory_space<vmem>>, vector<1x8x256xf32>
    %116 = vector.shape_cast %115 : vector<1x8x256xf32> to vector<8x256xf32>
    %117 = arith.truncf %113 : vector<8x64xf32> to vector<8x64xbf16>
    %cst_34 = arith.constant dense<0.000000e+00> : vector<8x256xf32>
    %118 = tpu.matmul %117, %23, %cst_34 {dimension_numbers = #tpu.dot_dimension_numbers<[1], [0], [0], [1], [0, 0, 1, 1], [], []>} : vector<8x64xbf16>, vector<64x256xbf16>, vector<8x256xf32> -> vector<8x256xf32>
    %119 = arith.addf %116, %118 : vector<8x256xf32>
    %120 = arith.negf %119 : vector<8x256xf32>
    %121 = math.exp %120 : vector<8x256xf32>
    %cst_35 = arith.constant 1.000000e+00 : f32
    %122 = vector.broadcast %cst_35 : f32 to vector<8x256xf32>
    %123 = arith.addf %122, %121 : vector<8x256xf32>
    %124 = arith.divf %122, %123 : vector<8x256xf32>
    %125 = vector.extract_strided_slice %119 {offsets = [0, 128], sizes = [8, 128], strides = [1, 1]} : vector<8x256xf32> to vector<8x128xf32>
    %126 = math.tanh %125 : vector<8x128xf32>
    %127 = vector.extract_strided_slice %124 {offsets = [0, 0], sizes = [8, 64], strides = [1, 1]} : vector<8x256xf32> to vector<8x64xf32>
    %128 = vector.extract_strided_slice %124 {offsets = [0, 64], sizes = [8, 64], strides = [1, 1]} : vector<8x256xf32> to vector<8x64xf32>
    %129 = vector.extract_strided_slice %124 {offsets = [0, 128], sizes = [8, 64], strides = [1, 1]} : vector<8x256xf32> to vector<8x64xf32>
    %130 = vector.extract_strided_slice %126 {offsets = [0, 64], sizes = [8, 64], strides = [1, 1]} : vector<8x128xf32> to vector<8x64xf32>
    %131 = arith.mulf %128, %111 : vector<8x64xf32>
    %132 = arith.mulf %127, %130 : vector<8x64xf32>
    %133 = arith.addf %131, %132 : vector<8x64xf32>
    %134 = math.tanh %133 : vector<8x64xf32>
    %135 = arith.mulf %129, %134 : vector<8x64xf32>
    %c5_i32 = arith.constant 5 : i32
    %136 = arith.index_cast %c5_i32 : i32 to index
    %c0_36 = arith.constant 0 : index
    %c0_37 = arith.constant 0 : index
    %137 = vector.load %arg11[%136, %c0_36, %c0_37] : memref<8x8x256xf32, #tpu.memory_space<vmem>>, vector<1x8x256xf32>
    %138 = vector.shape_cast %137 : vector<1x8x256xf32> to vector<8x256xf32>
    %139 = arith.truncf %135 : vector<8x64xf32> to vector<8x64xbf16>
    %cst_38 = arith.constant dense<0.000000e+00> : vector<8x256xf32>
    %140 = tpu.matmul %139, %23, %cst_38 {dimension_numbers = #tpu.dot_dimension_numbers<[1], [0], [0], [1], [0, 0, 1, 1], [], []>} : vector<8x64xbf16>, vector<64x256xbf16>, vector<8x256xf32> -> vector<8x256xf32>
    %141 = arith.addf %138, %140 : vector<8x256xf32>
    %142 = arith.negf %141 : vector<8x256xf32>
    %143 = math.exp %142 : vector<8x256xf32>
    %cst_39 = arith.constant 1.000000e+00 : f32
    %144 = vector.broadcast %cst_39 : f32 to vector<8x256xf32>
    %145 = arith.addf %144, %143 : vector<8x256xf32>
    %146 = arith.divf %144, %145 : vector<8x256xf32>
    %147 = vector.extract_strided_slice %141 {offsets = [0, 128], sizes = [8, 128], strides = [1, 1]} : vector<8x256xf32> to vector<8x128xf32>
    %148 = math.tanh %147 : vector<8x128xf32>
    %149 = vector.extract_strided_slice %146 {offsets = [0, 0], sizes = [8, 64], strides = [1, 1]} : vector<8x256xf32> to vector<8x64xf32>
    %150 = vector.extract_strided_slice %146 {offsets = [0, 64], sizes = [8, 64], strides = [1, 1]} : vector<8x256xf32> to vector<8x64xf32>
    %151 = vector.extract_strided_slice %146 {offsets = [0, 128], sizes = [8, 64], strides = [1, 1]} : vector<8x256xf32> to vector<8x64xf32>
    %152 = vector.extract_strided_slice %148 {offsets = [0, 64], sizes = [8, 64], strides = [1, 1]} : vector<8x128xf32> to vector<8x64xf32>
    %153 = arith.mulf %150, %133 : vector<8x64xf32>
    %154 = arith.mulf %149, %152 : vector<8x64xf32>
    %155 = arith.addf %153, %154 : vector<8x64xf32>
    %156 = math.tanh %155 : vector<8x64xf32>
    %157 = arith.mulf %151, %156 : vector<8x64xf32>
    %c6_i32 = arith.constant 6 : i32
    %158 = arith.index_cast %c6_i32 : i32 to index
    %c0_40 = arith.constant 0 : index
    %c0_41 = arith.constant 0 : index
    %159 = vector.load %arg11[%158, %c0_40, %c0_41] : memref<8x8x256xf32, #tpu.memory_space<vmem>>, vector<1x8x256xf32>
    %160 = vector.shape_cast %159 : vector<1x8x256xf32> to vector<8x256xf32>
    %161 = arith.truncf %157 : vector<8x64xf32> to vector<8x64xbf16>
    %cst_42 = arith.constant dense<0.000000e+00> : vector<8x256xf32>
    %162 = tpu.matmul %161, %23, %cst_42 {dimension_numbers = #tpu.dot_dimension_numbers<[1], [0], [0], [1], [0, 0, 1, 1], [], []>} : vector<8x64xbf16>, vector<64x256xbf16>, vector<8x256xf32> -> vector<8x256xf32>
    %163 = arith.addf %160, %162 : vector<8x256xf32>
    %164 = arith.negf %163 : vector<8x256xf32>
    %165 = math.exp %164 : vector<8x256xf32>
    %cst_43 = arith.constant 1.000000e+00 : f32
    %166 = vector.broadcast %cst_43 : f32 to vector<8x256xf32>
    %167 = arith.addf %166, %165 : vector<8x256xf32>
    %168 = arith.divf %166, %167 : vector<8x256xf32>
    %169 = vector.extract_strided_slice %163 {offsets = [0, 128], sizes = [8, 128], strides = [1, 1]} : vector<8x256xf32> to vector<8x128xf32>
    %170 = math.tanh %169 : vector<8x128xf32>
    %171 = vector.extract_strided_slice %168 {offsets = [0, 0], sizes = [8, 64], strides = [1, 1]} : vector<8x256xf32> to vector<8x64xf32>
    %172 = vector.extract_strided_slice %168 {offsets = [0, 64], sizes = [8, 64], strides = [1, 1]} : vector<8x256xf32> to vector<8x64xf32>
    %173 = vector.extract_strided_slice %168 {offsets = [0, 128], sizes = [8, 64], strides = [1, 1]} : vector<8x256xf32> to vector<8x64xf32>
    %174 = vector.extract_strided_slice %170 {offsets = [0, 64], sizes = [8, 64], strides = [1, 1]} : vector<8x128xf32> to vector<8x64xf32>
    %175 = arith.mulf %172, %155 : vector<8x64xf32>
    %176 = arith.mulf %171, %174 : vector<8x64xf32>
    %177 = arith.addf %175, %176 : vector<8x64xf32>
    %178 = math.tanh %177 : vector<8x64xf32>
    %179 = arith.mulf %173, %178 : vector<8x64xf32>
    %c7_i32 = arith.constant 7 : i32
    %180 = arith.index_cast %c7_i32 : i32 to index
    %c0_44 = arith.constant 0 : index
    %c0_45 = arith.constant 0 : index
    %181 = vector.load %arg11[%180, %c0_44, %c0_45] : memref<8x8x256xf32, #tpu.memory_space<vmem>>, vector<1x8x256xf32>
    %182 = vector.shape_cast %181 : vector<1x8x256xf32> to vector<8x256xf32>
    %183 = arith.truncf %179 : vector<8x64xf32> to vector<8x64xbf16>
    %cst_46 = arith.constant dense<0.000000e+00> : vector<8x256xf32>
    %184 = tpu.matmul %183, %23, %cst_46 {dimension_numbers = #tpu.dot_dimension_numbers<[1], [0], [0], [1], [0, 0, 1, 1], [], []>} : vector<8x64xbf16>, vector<64x256xbf16>, vector<8x256xf32> -> vector<8x256xf32>
    %185 = arith.addf %182, %184 : vector<8x256xf32>
    %186 = arith.negf %185 : vector<8x256xf32>
    %187 = math.exp %186 : vector<8x256xf32>
    %cst_47 = arith.constant 1.000000e+00 : f32
    %188 = vector.broadcast %cst_47 : f32 to vector<8x256xf32>
    %189 = arith.addf %188, %187 : vector<8x256xf32>
    %190 = arith.divf %188, %189 : vector<8x256xf32>
    %191 = vector.extract_strided_slice %185 {offsets = [0, 128], sizes = [8, 128], strides = [1, 1]} : vector<8x256xf32> to vector<8x128xf32>
    %192 = math.tanh %191 : vector<8x128xf32>
    %193 = vector.extract_strided_slice %190 {offsets = [0, 0], sizes = [8, 64], strides = [1, 1]} : vector<8x256xf32> to vector<8x64xf32>
    %194 = vector.extract_strided_slice %190 {offsets = [0, 64], sizes = [8, 64], strides = [1, 1]} : vector<8x256xf32> to vector<8x64xf32>
    %195 = vector.extract_strided_slice %190 {offsets = [0, 128], sizes = [8, 64], strides = [1, 1]} : vector<8x256xf32> to vector<8x64xf32>
    %196 = vector.extract_strided_slice %192 {offsets = [0, 64], sizes = [8, 64], strides = [1, 1]} : vector<8x128xf32> to vector<8x64xf32>
    %197 = arith.mulf %194, %177 : vector<8x64xf32>
    %198 = arith.mulf %193, %196 : vector<8x64xf32>
    %199 = arith.addf %197, %198 : vector<8x64xf32>
    %200 = math.tanh %199 : vector<8x64xf32>
    %201 = arith.mulf %195, %200 : vector<8x64xf32>
    %c8_i32 = arith.constant 8 : i32
    %c0_48 = arith.constant 0 : index
    %c0_49 = arith.constant 0 : index
    %202 = vector.load %arg12[%c0_48, %c0_49] : memref<8x64xf32, #tpu.memory_space<vmem>>, vector<8x64xf32>
    tpu.vector_store %arg12[%c0_48, %c0_49], %201 {strides = array<i32>} : memref<8x64xf32, #tpu.memory_space<vmem>>, vector<8x64xf32>,
    %c0_50 = arith.constant 0 : index
    %c0_51 = arith.constant 0 : index
    %203 = vector.load %arg13[%c0_50, %c0_51] : memref<8x64xf32, #tpu.memory_space<vmem>>, vector<8x64xf32>
    tpu.vector_store %arg13[%c0_50, %c0_51], %199 {strides = array<i32>} : memref<8x64xf32, #tpu.memory_space<vmem>>, vector<8x64xf32>,
    %c0_i32_52 = arith.constant 0 : i32
    %204 = arith.cmpi eq, %arg1, %c0_i32_52 : i32
    %205 = arith.extui %204 : i1 to i32
    %c0_i32_53 = arith.constant 0 : i32
    %206 = arith.cmpi ne, %205, %c0_i32_53 : i32
    scf.if %206 {
      %207 = arith.truncf %201 : vector<8x64xf32> to vector<8x64xbf16>
      %c0_54 = arith.constant 0 : index
      %c0_55 = arith.constant 0 : index
      %208 = vector.load %arg6[%c0_54, %c0_55] : memref<64x32xbf16, #tpu.memory_space<vmem>>, vector<64x32xbf16>
      %cst_56 = arith.constant dense<0.000000e+00> : vector<8x32xf32>
      %209 = tpu.matmul %207, %208, %cst_56 {dimension_numbers = #tpu.dot_dimension_numbers<[1], [0], [0], [1], [0, 0, 1, 1], [], []>} : vector<8x64xbf16>, vector<64x32xbf16>, vector<8x32xf32> -> vector<8x32xf32>
      %c0_57 = arith.constant 0 : index
      %c0_58 = arith.constant 0 : index
      %210 = vector.load %arg7[%c0_57, %c0_58] : memref<1x32xf32, #tpu.memory_space<vmem>>, vector<1x32xf32>
      %211 = vector.broadcast %210 : vector<1x32xf32> to vector<8x32xf32>
      %212 = arith.addf %209, %211 : vector<8x32xf32>
      %cst_59 = arith.constant 0.000000e+00 : f32
      %213 = vector.broadcast %cst_59 : f32 to vector<8x32xf32>
      %214 = arith.maximumf %212, %213 : vector<8x32xf32>
      %c0_60 = arith.constant 0 : index
      %c0_61 = arith.constant 0 : index
      %215 = vector.load %arg8[%c0_60, %c0_61] : memref<1x32xf32, #tpu.memory_space<vmem>>, vector<1x32xf32>
      %216 = vector.broadcast %215 : vector<1x32xf32> to vector<8x32xf32>
      %217 = arith.mulf %214, %216 : vector<8x32xf32>
      %cst_62 = arith.constant dense<0.000000e+00> : vector<8xf32>
      %218 = vector.multi_reduction <add>, %217, %cst_62 [1] : vector<8x32xf32> to vector<8xf32>
      %219 = vector.shape_cast %218 : vector<8xf32> to vector<8x1xf32>
      %c0_63 = arith.constant 0 : index
      %c0_64 = arith.constant 0 : index
      %220 = vector.load %arg9[%c0_63, %c0_64] : memref<1x1xf32, #tpu.memory_space<vmem>>, vector<1x1xf32>
      %221 = vector.broadcast %220 : vector<1x1xf32> to vector<8x1xf32>
      %222 = arith.addf %219, %221 : vector<8x1xf32>
      %223 = vector.shape_cast %222 : vector<8x1xf32> to vector<8x1xf32>
      %224 = vector.broadcast %223 : vector<8x1xf32> to vector<8x128xf32>
      %c0_65 = arith.constant 0 : index
      %c0_66 = arith.constant 0 : index
      %225 = vector.load %arg10[%c0_65, %c0_66] : memref<8x128xf32, #tpu.memory_space<vmem>>, vector<8x128xf32>
      tpu.vector_store %arg10[%c0_65, %c0_66], %224 {strides = array<i32>} : memref<8x128xf32, #tpu.memory_space<vmem>>, vector<8x128xf32>,
    } else {
    }
    return
  }
  func.func @transform_0(%arg0: i32, %arg1: i32) -> (i32, i32, i32) {
    %c0_i32 = arith.constant 0 : i32
    %c0_i32_0 = arith.constant 0 : i32
    return %arg1, %arg0, %c0_i32 : i32, i32, i32
  }
  func.func @transform_1(%arg0: i32, %arg1: i32) -> (i32, i32) {
    %c0_i32 = arith.constant 0 : i32
    %c0_i32_0 = arith.constant 0 : i32
    %c0_i32_1 = arith.constant 0 : i32
    return %c0_i32, %c0_i32_0 : i32, i32
  }
  func.func @transform_2(%arg0: i32, %arg1: i32) -> (i32, i32) {
    %c0_i32 = arith.constant 0 : i32
    %c0_i32_0 = arith.constant 0 : i32
    %c0_i32_1 = arith.constant 0 : i32
    return %c0_i32, %c0_i32_0 : i32, i32
  }
  func.func @transform_3(%arg0: i32, %arg1: i32) -> (i32, i32) {
    %c0_i32 = arith.constant 0 : i32
    %c0_i32_0 = arith.constant 0 : i32
    %c0_i32_1 = arith.constant 0 : i32
    return %c0_i32, %c0_i32_0 : i32, i32
  }
  func.func @transform_4(%arg0: i32, %arg1: i32) -> (i32, i32) {
    %c0_i32 = arith.constant 0 : i32
    %c0_i32_0 = arith.constant 0 : i32
    %c0_i32_1 = arith.constant 0 : i32
    return %c0_i32, %c0_i32_0 : i32, i32
  }
  func.func @transform_5(%arg0: i32, %arg1: i32) -> (i32, i32) {
    %c0_i32 = arith.constant 0 : i32
    %c0_i32_0 = arith.constant 0 : i32
    %c0_i32_1 = arith.constant 0 : i32
    return %c0_i32, %c0_i32_0 : i32, i32
  }
  func.func @transform_6(%arg0: i32, %arg1: i32) -> (i32, i32) {
    %c0_i32 = arith.constant 0 : i32
    %c0_i32_0 = arith.constant 0 : i32
    %c0_i32_1 = arith.constant 0 : i32
    return %c0_i32, %c0_i32_0 : i32, i32
  }
  func.func @transform_7(%arg0: i32, %arg1: i32) -> (i32, i32) {
    %c0_i32 = arith.constant 0 : i32
    %c0_i32_0 = arith.constant 0 : i32
    %c0_i32_1 = arith.constant 0 : i32
    return %c0_i32, %c0_i32_0 : i32, i32
  }
  func.func @transform_8(%arg0: i32, %arg1: i32) -> (i32, i32) {
    %c0_i32 = arith.constant 0 : i32
    %c0_i32_0 = arith.constant 0 : i32
    return %arg0, %c0_i32 : i32, i32
  }
}

</mosaic_0001>

<llo_original>
// kernel: tpu_custom_call.1
$region0: #{tpu_custom_call.1}
  #allocation0 [shape = 'u32[]', space=smem, size = 0x4, offset = 0x4, fixed_abs, tag = 'smem constant byte address 0x4 - core index']
  #allocation1 [shape = 'u32[144,128]{1,0:T(1,128)}', space=vmem, size = 0x12000, scoped, tag = 'internal scratch']
  #allocation2 [shape = 'f32[8,8,256]{2,1,0:T(8,128)}', space=vmem, size = 0x10000, scoped, tag = 'scratch operand']
  #allocation3 [shape = 'f32[8,64]{1,0:T(8,128)}', space=vmem, size = 0x1000, scoped, tag = 'scratch operand']
  #allocation4 [shape = 'f32[8,64]{1,0:T(8,128)}', space=vmem, size = 0x1000, scoped, tag = 'scratch operand']
  #allocation5 [shape = 'f32[1,1]{1,0:T(1,128)S(1)}', space=vmem, size = 0x200, scoped, tag = 'scoped memory for tpu_custom_call.1']
  %s0 = inlined_call_operand.vmem [shape: f32[8,8,2], index: 0, kind: input, shape index: {}]
  %s1 = inlined_call_operand.vmem [shape: f32[2,256], index: 1, kind: input, shape index: {}]
  %s2 = inlined_call_operand.vmem [shape: bf16[64,256], index: 2, kind: input, shape index: {}]
  %s3 = inlined_call_operand.vmem [shape: f32[1,256], index: 3, kind: input, shape index: {}]
  %s4 = inlined_call_operand.vmem [shape: bf16[64,32], index: 4, kind: input, shape index: {}]
  %s5 = inlined_call_operand.vmem [shape: f32[1,32], index: 5, kind: input, shape index: {}]
  %s6 = inlined_call_operand.vmem [shape: f32[1,32], index: 6, kind: input, shape index: {}]
  %s7 = inlined_call_operand.<no memory space> [shape: f32[1,1], index: 7, kind: input, shape index: {}]
  %s8 = inlined_call_operand.hbm [shape: f32[8,128], index: 8, kind: output, shape index: {}]
  %s9 = sld [smem:[#allocation0]]
  $region50: #{tpu_custom_call.1} parent=0
    _
  %s11 = ssub.s32 1, %s9
  %s12 = scalar_select 0, %s11, %s9
  %v13 = vstv %s7
  %14 = vst [vmem:[#allocation5] sm:$0x1] %v13
  $region1: #{tpu_custom_call.1} parent=0
    #allocation6 [shape = 'u8[4096]{0}', space=vmem, size = 0x1000, scoped, tag = 'output window, operand 0, single buffered']
    #allocation7 [shape = 's32[1]{0}', space=sflag, size = 0x4, scoped, tag = 'scoped memory for tpu_custom_call.1']
    %15 = vsyncpa [#allocation7], 0
    // Predicated region
    $region2: #{tpu_custom_call.1} parent=1 // pred_check
      _
    $region3: #{tpu_custom_call.1} parent=1 // pred_check_branch
      %17 = sbr.rel (0) target = $region5
    $region4: #{tpu_custom_call.1} parent=1 // pred_region
      _
    $region5: #{tpu_custom_call.1} parent=1 // pred_fallthru
      _
    // Predicated region
    $region6: #{tpu_custom_call.1} parent=1 // pred_check
      _
    $region7: #{tpu_custom_call.1} parent=1 // pred_check_branch
      %19 = sbr.rel (0) target = $region9
    $region8: #{tpu_custom_call.1} parent=1 // pred_region
      _
    $region9: #{tpu_custom_call.1} parent=1 // pred_fallthru
      _
    // Predicated region
    $region10: #{tpu_custom_call.1} parent=1 // pred_check
      _
    $region11: #{tpu_custom_call.1} parent=1 // pred_check_branch
      %21 = sbr.rel (0) target = $region13
    $region12: #{tpu_custom_call.1} parent=1 // pred_region
      _
    $region13: #{tpu_custom_call.1} parent=1 // pred_fallthru
      _
    // Predicated region
    $region14: #{tpu_custom_call.1} parent=1 // pred_check
      _
    $region15: #{tpu_custom_call.1} parent=1 // pred_check_branch
      %23 = sbr.rel (0) target = $region17
    $region16: #{tpu_custom_call.1} parent=1 // pred_region
      _
    $region17: #{tpu_custom_call.1} parent=1 // pred_fallthru
      _
    // Predicated region
    $region18: #{tpu_custom_call.1} parent=1 // pred_check
      _
    $region19: #{tpu_custom_call.1} parent=1 // pred_check_branch
      %25 = sbr.rel (0) target = $region21
    $region20: #{tpu_custom_call.1} parent=1 // pred_region
      _
    $region21: #{tpu_custom_call.1} parent=1 // pred_fallthru
      _
    // Predicated region
    $region22: #{tpu_custom_call.1} parent=1 // pred_check
      _
    $region23: #{tpu_custom_call.1} parent=1 // pred_check_branch
      %27 = sbr.rel (0) target = $region25
    $region24: #{tpu_custom_call.1} parent=1 // pred_region
      _
    $region25: #{tpu_custom_call.1} parent=1 // pred_fallthru
      _
    // Predicated region
    $region26: #{tpu_custom_call.1} parent=1 // pred_check
      _
    $region27: #{tpu_custom_call.1} parent=1 // pred_check_branch
      %29 = sbr.rel (0) target = $region29
    $region28: #{tpu_custom_call.1} parent=1 // pred_region
      _
    $region29: #{tpu_custom_call.1} parent=1 // pred_fallthru
      _
    // Predicated region
    $region30: #{tpu_custom_call.1} parent=1 // pred_check
      _
    $region31: #{tpu_custom_call.1} parent=1 // pred_check_branch
      %31 = sbr.rel (0) target = $region33
    $region32: #{tpu_custom_call.1} parent=1 // pred_region
      _
    $region33: #{tpu_custom_call.1} parent=1 // pred_fallthru
      _
    %p33 = scmp.eq.s32.totalorder 0, 0
    // Predicated region
    $region34: #{tpu_custom_call.1} parent=1 // pred_check
      %p34 = pneg %p33
    $region35: #{tpu_custom_call.1} parent=1 // pred_check_branch
      %36 = sbr.rel (%p34) target = $region37
    $region36: #{tpu_custom_call.1} parent=1 // pred_region
      %vm37 = vcmask 523264
      %38 = vst.msk [vmem:[#allocation3] sm:$0xff] %vm37, 0.0
      %39 = vst.msk [vmem:[#allocation4] sm:$0xff] %vm37, 0.0
    $region37: #{tpu_custom_call.1} parent=1 // pred_fallthru
      _
    %v40 = vld [vmem:[%s0] sm:$0xff]
    %v41 = vld [vmem:[%s0 + $0x8] sm:$0xff]
    %v42 = vld [vmem:[%s0 + $0x10] sm:$0xff]
    %v43 = vld [vmem:[%s0 + $0x18] sm:$0xff]
    %v44 = vld [vmem:[%s0 + $0x20] sm:$0xff]
    %v45 = vld [vmem:[%s0 + $0x28] sm:$0xff]
    %v46 = vld [vmem:[%s0 + $0x30] sm:$0xff]
    %v47 = vld [vmem:[%s0 + $0x38] sm:$0xff]
    %v48 = vld [vmem:[%s1] sm:$0xf]
    %50 = vset.pattern.permute.xlu0 0
    %51 = vperm.xlu0 %50, %v40
    %v52 = vpop.permute.xlu0 %51
    %55 = vset.pattern.permute.xlu0 0
    %56 = vperm.xlu0 %55, %v41
    %v57 = vpop.permute.xlu0 %56
    %60 = vset.pattern.permute.xlu0 0
    %61 = vperm.xlu0 %60, %v42
    %v62 = vpop.permute.xlu0 %61
    %65 = vset.pattern.permute.xlu0 0
    %66 = vperm.xlu0 %65, %v43
    %v67 = vpop.permute.xlu0 %66
    %70 = vset.pattern.permute.xlu0 0
    %71 = vperm.xlu0 %70, %v44
    %v72 = vpop.permute.xlu0 %71
    %75 = vset.pattern.permute.xlu0 0
    %76 = vperm.xlu0 %75, %v45
    %v77 = vpop.permute.xlu0 %76
    %80 = vset.pattern.permute.xlu0 0
    %81 = vperm.xlu0 %80, %v46
    %v82 = vpop.permute.xlu0 %81
    %85 = vset.pattern.permute.xlu0 0
    %86 = vperm.xlu0 %85, %v47
    %v87 = vpop.permute.xlu0 %86
    %v90 = vlaneseq
    %v91 = vshrl.u32 %v90, 7
    %v92 = vsub.s32 0, %v91
    %v93 = vrot.slane %v48, %v92
    %v94 = vlaneseq
    %v95 = vshrl.u32 %v94, 7
    %v96 = vsub.s32 2, %v95
    %v97 = vrot.slane %v48, %v96
    %v100 = vlaneseq
    %v101 = vshrl.u32 %v100, 7
    %v102 = vsub.s32 0, %v101
    %v103 = vrot.slane %v93, %v102
    %v104 = vlaneseq
    %v105 = vshrl.u32 %v104, 7
    %v106 = vsub.s32 0, %v105
    %v107 = vrot.slane %v97, %v106
    %v108 = vmul.f32 %v52, %v103
    %v109 = vmul.f32 %v52, %v107
    %v110 = vmul.f32 %v57, %v103
    %v111 = vmul.f32 %v57, %v107
    %v112 = vmul.f32 %v62, %v103
    %v113 = vmul.f32 %v62, %v107
    %v114 = vmul.f32 %v67, %v103
    %v115 = vmul.f32 %v67, %v107
    %v116 = vmul.f32 %v72, %v103
    %v117 = vmul.f32 %v72, %v107
    %v118 = vmul.f32 %v77, %v103
    %v119 = vmul.f32 %v77, %v107
    %v120 = vmul.f32 %v82, %v103
    %v121 = vmul.f32 %v82, %v107
    %v122 = vmul.f32 %v87, %v103
    %v123 = vmul.f32 %v87, %v107
    %124 = vset.pattern.permute.xlu0 1
    %125 = vperm.xlu0 %124, %v40
    %v126 = vpop.permute.xlu0 %125
    %128 = vset.pattern.permute.xlu0 1
    %129 = vperm.xlu0 %128, %v41
    %v130 = vpop.permute.xlu0 %129
    %132 = vset.pattern.permute.xlu0 1
    %133 = vperm.xlu0 %132, %v42
    %v134 = vpop.permute.xlu0 %133
    %136 = vset.pattern.permute.xlu0 1
    %137 = vperm.xlu0 %136, %v43
    %v138 = vpop.permute.xlu0 %137
    %140 = vset.pattern.permute.xlu0 1
    %141 = vperm.xlu0 %140, %v44
    %v142 = vpop.permute.xlu0 %141
    %144 = vset.pattern.permute.xlu0 1
    %145 = vperm.xlu0 %144, %v45
    %v146 = vpop.permute.xlu0 %145
    %148 = vset.pattern.permute.xlu0 1
    %149 = vperm.xlu0 %148, %v46
    %v150 = vpop.permute.xlu0 %149
    %152 = vset.pattern.permute.xlu0 1
    %153 = vperm.xlu0 %152, %v47
    %v154 = vpop.permute.xlu0 %153
    %v156 = vlaneseq
    %v157 = vshrl.u32 %v156, 7
    %v158 = vsub.s32 1, %v157
    %v159 = vrot.slane %v48, %v158
    %v160 = vlaneseq
    %v161 = vshrl.u32 %v160, 7
    %v162 = vsub.s32 3, %v161
    %v163 = vrot.slane %v48, %v162
    %v166 = vlaneseq
    %v167 = vshrl.u32 %v166, 7
    %v168 = vsub.s32 1, %v167
    %v169 = vrot.slane %v159, %v168
    %v170 = vlaneseq
    %v171 = vshrl.u32 %v170, 7
    %v172 = vsub.s32 1, %v171
    %v173 = vrot.slane %v163, %v172
    %v174 = vmul.f32 %v126, %v169
    %v175 = vmul.f32 %v126, %v173
    %v176 = vmul.f32 %v130, %v169
    %v177 = vmul.f32 %v130, %v173
    %v178 = vmul.f32 %v134, %v169
    %v179 = vmul.f32 %v134, %v173
    %v180 = vmul.f32 %v138, %v169
    %v181 = vmul.f32 %v138, %v173
    %v182 = vmul.f32 %v142, %v169
    %v183 = vmul.f32 %v142, %v173
    %v184 = vmul.f32 %v146, %v169
    %v185 = vmul.f32 %v146, %v173
    %v186 = vmul.f32 %v150, %v169
    %v187 = vmul.f32 %v150, %v173
    %v188 = vmul.f32 %v154, %v169
    %v189 = vmul.f32 %v154, %v173
    %v190 = vadd.f32 %v108, %v174
    %v191 = vadd.f32 %v109, %v175
    %v192 = vadd.f32 %v110, %v176
    %v193 = vadd.f32 %v111, %v177
    %v194 = vadd.f32 %v112, %v178
    %v195 = vadd.f32 %v113, %v179
    %v196 = vadd.f32 %v114, %v180
    %v197 = vadd.f32 %v115, %v181
    %v198 = vadd.f32 %v116, %v182
    %v199 = vadd.f32 %v117, %v183
    %v200 = vadd.f32 %v118, %v184
    %v201 = vadd.f32 %v119, %v185
    %v202 = vadd.f32 %v120, %v186
    %v203 = vadd.f32 %v121, %v187
    %v204 = vadd.f32 %v122, %v188
    %v205 = vadd.f32 %v123, %v189
    %v206 = vld [vmem:[%s3] sm:$0x3]
    %v208 = vlaneseq
    %v209 = vshrl.u32 %v208, 7
    %v210 = vsub.s32 0, %v209
    %v211 = vrot.slane %v206, %v210
    %v212 = vlaneseq
    %v213 = vshrl.u32 %v212, 7
    %v214 = vsub.s32 1, %v213
    %v215 = vrot.slane %v206, %v214
    %v218 = vadd.f32 %v190, %v211
    %v219 = vadd.f32 %v191, %v215
    %v220 = vadd.f32 %v192, %v211
    %v221 = vadd.f32 %v193, %v215
    %v222 = vadd.f32 %v194, %v211
    %v223 = vadd.f32 %v195, %v215
    %v224 = vadd.f32 %v196, %v211
    %v225 = vadd.f32 %v197, %v215
    %v226 = vadd.f32 %v198, %v211
    %v227 = vadd.f32 %v199, %v215
    %v228 = vadd.f32 %v200, %v211
    %v229 = vadd.f32 %v201, %v215
    %v230 = vadd.f32 %v202, %v211
    %v231 = vadd.f32 %v203, %v215
    %v232 = vadd.f32 %v204, %v211
    %v233 = vadd.f32 %v205, %v215
    %234 = vst [vmem:[#allocation2] sm:$0xff] %v218
    %235 = vst [vmem:[#allocation2 + $0x8] sm:$0xff] %v219
    %236 = vst [vmem:[#allocation2 + $0x10] sm:$0xff] %v220
    %237 = vst [vmem:[#allocation2 + $0x18] sm:$0xff] %v221
    %238 = vst [vmem:[#allocation2 + $0x20] sm:$0xff] %v222
    %239 = vst [vmem:[#allocation2 + $0x28] sm:$0xff] %v223
    %240 = vst [vmem:[#allocation2 + $0x30] sm:$0xff] %v224
    %241 = vst [vmem:[#allocation2 + $0x38] sm:$0xff] %v225
    %242 = vst [vmem:[#allocation2 + $0x40] sm:$0xff] %v226
    %243 = vst [vmem:[#allocation2 + $0x48] sm:$0xff] %v227
    %244 = vst [vmem:[#allocation2 + $0x50] sm:$0xff] %v228
    %245 = vst [vmem:[#allocation2 + $0x58] sm:$0xff] %v229
    %246 = vst [vmem:[#allocation2 + $0x60] sm:$0xff] %v230
    %247 = vst [vmem:[#allocation2 + $0x68] sm:$0xff] %v231
    %248 = vst [vmem:[#allocation2 + $0x70] sm:$0xff] %v232
    %249 = vst [vmem:[#allocation2 + $0x78] sm:$0xff] %v233
    %v250 = vld [vmem:[%s2] sm:$0xff]
    %v251 = vld [vmem:[%s2 + $0x8] sm:$0xff]
    %v252 = vld [vmem:[%s2 + $0x10] sm:$0xff]
    %v253 = vld [vmem:[%s2 + $0x18] sm:$0xff]
    %v254 = vld [vmem:[%s2 + $0x20] sm:$0xff]
    %v255 = vld [vmem:[%s2 + $0x28] sm:$0xff]
    %v256 = vld [vmem:[%s2 + $0x30] sm:$0xff]
    %v257 = vld [vmem:[%s2 + $0x38] sm:$0xff]
    %v258 = vld [vmem:[#allocation3] sm:$0xff]
    %v259 = vld [vmem:[#allocation4] sm:$0xff]
    %v260 = vld [vmem:[#allocation2] sm:$0xff]
    %v261 = vld [vmem:[#allocation2 + $0x8] sm:$0xff]
    %v262 = vpack.c.bf16 %v258, %v258
    %v271 = vunpack.c.l.b16 %v250
    %v272 = vunpack.c.h.b16 %v250
    %v273 = vunpack.c.l.b16 %v251
    %v274 = vunpack.c.h.b16 %v251
    %v275 = vunpack.c.l.b16 %v252
    %v276 = vunpack.c.h.b16 %v252
    %v277 = vunpack.c.l.b16 %v253
    %v278 = vunpack.c.h.b16 %v253
    %v279 = vunpack.c.l.b16 %v254
    %v280 = vunpack.c.h.b16 %v254
    %v281 = vunpack.c.l.b16 %v255
    %v282 = vunpack.c.h.b16 %v255
    %v283 = vunpack.c.l.b16 %v256
    %v284 = vunpack.c.h.b16 %v256
    %v285 = vunpack.c.l.b16 %v257
    %v286 = vunpack.c.h.b16 %v257
    %v287 = vpack.c.b16 %v273, %v271
    %v288 = vpack.c.b16 %v274, %v272
    %v289 = vpack.c.b16 %v277, %v275
    %v290 = vpack.c.b16 %v278, %v276
    %v291 = vpack.c.b16 %v281, %v279
    %v292 = vpack.c.b16 %v282, %v280
    %v293 = vpack.c.b16 %v285, %v283
    %v294 = vpack.c.b16 %v286, %v284
    %vm303 = vcmask 523264
    %v305 = vsel %vm303, %v262, 0
    %307 = vmatprep.subr.bf16.mxu0 %v288
    %308 = vmatpush1.bf16.msra.mxu0 %v287
    %309 = vmatprep.subr.bf16.mxu0 %v290
    %310 = vmatpush1.bf16.msra.mxu0 %v289
    %311 = vmatprep.subr.bf16.mxu0 %v292
    %312 = vmatpush1.bf16.msra.mxu0 %v291
    %313 = vmatprep.subr.bf16.mxu0 %v294
    %314 = vmatpush1.bf16.msra.mxu0 %v293
    %315 = vmatprep.subr.bf16.mxu0 0
    %316 = vmatpush1.bf16.msra.mxu0 0
    %317 = vmatprep.subr.bf16.mxu0 0
    %318 = vmatpush1.bf16.msra.mxu0 0
    %319 = vmatprep.subr.bf16.mxu0 0
    %320 = vmatpush1.bf16.msra.mxu0 0
    %321 = vmatprep.subr.bf16.mxu0 0
    %322 = vmatpush1.bf16.msra.mxu0 0
    %323 = vmatprep.subr.bf16.mxu0 0
    %324 = vmatpush1.bf16.msra.mxu0 0
    %325 = vmatprep.subr.bf16.mxu0 0
    %326 = vmatpush1.bf16.msra.mxu0 0
    %327 = vmatprep.subr.bf16.mxu0 0
    %328 = vmatpush1.bf16.msra.mxu0 0
    %329 = vmatprep.subr.bf16.mxu0 0
    %330 = vmatpush1.bf16.msra.mxu0 0
    %331 = vmatprep.subr.bf16.mxu0 0
    %332 = vmatpush1.bf16.msra.mxu0 0
    %333 = vmatprep.subr.bf16.mxu0 0
    %334 = vmatpush1.bf16.msra.mxu0 0
    %335 = vmatprep.subr.bf16.mxu0 0
    %336 = vmatpush1.bf16.msra.mxu0 0
    %337 = vmatprep.subr.bf16.mxu0 0
    %338 = vmatpush1.bf16.msra.mxu0 0
    %339 = vmatprep.mubr.bf16.mxu0 0
    %340 = vmatmul.mubr.bf16.gmra.mrb[0].mxu0 %v305
    %v341 = vpop.f32.mrb[0].mxu0
    %v342 = vadd.f32 0.0, %v341
    %v343 = vpop.f32.mrb[0].mxu0
    %v344 = vadd.f32 0.0, %v343
    %v345 = vpop.f32.mrb[0].mxu0
    %v346 = vpop.f32.mrb[0].mxu0
    %347 = vdwg.mxu0
    %v348 = vadd.f32 %v260, %v342
    %v349 = vadd.f32 %v261, %v344
    %v350 = vxor.u32 %v348, 2147483648
    %v351 = vxor.u32 %v349, 2147483648
    %v352 = vmul.f32 %v350, 1.442695
    %v353 = vpow.pop %v352
    %v354 = vmul.f32 %v351, 1.442695
    %v355 = vpow.pop %v354
    %v356 = vadd.f32 %v353, 1.0
    %v357 = vadd.f32 %v355, 1.0
    %v358 = vrcp.pop %v356
    %v359 = vmul.f32 1.0, %v358
    %v360 = vrcp.pop %v357
    %v361 = vmul.f32 1.0, %v360
    %v362 = vtanh.pop %v349
    %364 = vrot.lane.b32.xlu0 %v259, 64
    %v365 = vpop.permute.xlu0 %364
    %v367 = vmul.f32 %v359, %v365
    %369 = vrot.lane.b32.xlu0 %v362, 64
    %v370 = vpop.permute.xlu0 %369
    %v372 = vmul.f32 %v359, %v370
    %374 = vrot.lane.b32.xlu0 %v372, 64
    %v375 = vpop.permute.xlu0 %374
    %v377 = vadd.f32 %v367, %v375
    %v378 = vtanh.pop %v377
    %380 = vrot.lane.b32.xlu0 %v378, 64
    %v381 = vpop.permute.xlu0 %380
    %v383 = vmul.f32 %v361, %v381
    %s384 = scalar_lea.vmem [#allocation2], 16
    %v385 = vld [vmem:[%s384] sm:$0xff]
    %v386 = vld [vmem:[%s384 + $0x8] sm:$0xff]
    %v387 = vpack.c.bf16 %v383, %v383
    %v389 = vsel %vm303, %v387, 0
    %391 = vmatprep.subr.bf16.mxu0 %v288
    %392 = vmatpush1.bf16.msra.mxu0 %v287
    %393 = vmatprep.subr.bf16.mxu0 %v290
    %394 = vmatpush1.bf16.msra.mxu0 %v289
    %395 = vmatprep.subr.bf16.mxu0 %v292
    %396 = vmatpush1.bf16.msra.mxu0 %v291
    %397 = vmatprep.subr.bf16.mxu0 %v294
    %398 = vmatpush1.bf16.msra.mxu0 %v293
    %399 = vmatprep.subr.bf16.mxu0 0
    %400 = vmatpush1.bf16.msra.mxu0 0
    %401 = vmatprep.subr.bf16.mxu0 0
    %402 = vmatpush1.bf16.msra.mxu0 0
    %403 = vmatprep.subr.bf16.mxu0 0
    %404 = vmatpush1.bf16.msra.mxu0 0
    %405 = vmatprep.subr.bf16.mxu0 0
    %406 = vmatpush1.bf16.msra.mxu0 0
    %407 = vmatprep.subr.bf16.mxu0 0
    %408 = vmatpush1.bf16.msra.mxu0 0
    %409 = vmatprep.subr.bf16.mxu0 0
    %410 = vmatpush1.bf16.msra.mxu0 0
    %411 = vmatprep.subr.bf16.mxu0 0
    %412 = vmatpush1.bf16.msra.mxu0 0
    %413 = vmatprep.subr.bf16.mxu0 0
    %414 = vmatpush1.bf16.msra.mxu0 0
    %415 = vmatprep.subr.bf16.mxu0 0
    %416 = vmatpush1.bf16.msra.mxu0 0
    %417 = vmatprep.subr.bf16.mxu0 0
    %418 = vmatpush1.bf16.msra.mxu0 0
    %419 = vmatprep.subr.bf16.mxu0 0
    %420 = vmatpush1.bf16.msra.mxu0 0
    %421 = vmatprep.subr.bf16.mxu0 0
    %422 = vmatpush1.bf16.msra.mxu0 0
    %423 = vmatprep.mubr.bf16.mxu0 0
    %424 = vmatmul.mubr.bf16.gmra.mrb[0].mxu0 %v389
    %v425 = vpop.f32.mrb[0].mxu0
    %v426 = vadd.f32 0.0, %v425
    %v427 = vpop.f32.mrb[0].mxu0
    %v428 = vadd.f32 0.0, %v427
    %v429 = vpop.f32.mrb[0].mxu0
    %v430 = vpop.f32.mrb[0].mxu0
    %431 = vdwg.mxu0
    %v432 = vadd.f32 %v385, %v426
    %v433 = vadd.f32 %v386, %v428
    %v434 = vxor.u32 %v432, 2147483648
    %v435 = vxor.u32 %v433, 2147483648
    %v436 = vmul.f32 %v434, 1.442695
    %v437 = vpow.pop %v436
    %v438 = vmul.f32 %v435, 1.442695
    %v439 = vpow.pop %v438
    %v440 = vadd.f32 %v437, 1.0
    %v441 = vadd.f32 %v439, 1.0
    %v442 = vrcp.pop %v440
    %v443 = vmul.f32 1.0, %v442
    %v444 = vrcp.pop %v441
    %v445 = vmul.f32 1.0, %v444
    %v446 = vtanh.pop %v433
    %v447 = vmul.f32 %v443, %v377
    %449 = vrot.lane.b32.xlu0 %v446, 64
    %v450 = vpop.permute.xlu0 %449
    %v452 = vmul.f32 %v443, %v450
    %454 = vrot.lane.b32.xlu0 %v452, 64
    %v455 = vpop.permute.xlu0 %454
    %v457 = vadd.f32 %v447, %v455
    %v458 = vtanh.pop %v457
    %460 = vrot.lane.b32.xlu0 %v458, 64
    %v461 = vpop.permute.xlu0 %460
    %v463 = vmul.f32 %v445, %v461
    %s464 = scalar_lea.vmem [#allocation2], 32
    %v465 = vld [vmem:[%s464] sm:$0xff]
    %v466 = vld [vmem:[%s464 + $0x8] sm:$0xff]
    %v467 = vpack.c.bf16 %v463, %v463
    %v469 = vsel %vm303, %v467, 0
    %471 = vmatprep.subr.bf16.mxu0 %v288
    %472 = vmatpush1.bf16.msra.mxu0 %v287
    %473 = vmatprep.subr.bf16.mxu0 %v290
    %474 = vmatpush1.bf16.msra.mxu0 %v289
    %475 = vmatprep.subr.bf16.mxu0 %v292
    %476 = vmatpush1.bf16.msra.mxu0 %v291
    %477 = vmatprep.subr.bf16.mxu0 %v294
    %478 = vmatpush1.bf16.msra.mxu0 %v293
    %479 = vmatprep.subr.bf16.mxu0 0
    %480 = vmatpush1.bf16.msra.mxu0 0
    %481 = vmatprep.subr.bf16.mxu0 0
    %482 = vmatpush1.bf16.msra.mxu0 0
    %483 = vmatprep.subr.bf16.mxu0 0
    %484 = vmatpush1.bf16.msra.mxu0 0
    %485 = vmatprep.subr.bf16.mxu0 0
    %486 = vmatpush1.bf16.msra.mxu0 0
    %487 = vmatprep.subr.bf16.mxu0 0
    %488 = vmatpush1.bf16.msra.mxu0 0
    %489 = vmatprep.subr.bf16.mxu0 0
    %490 = vmatpush1.bf16.msra.mxu0 0
    %491 = vmatprep.subr.bf16.mxu0 0
    %492 = vmatpush1.bf16.msra.mxu0 0
    %493 = vmatprep.subr.bf16.mxu0 0
    %494 = vmatpush1.bf16.msra.mxu0 0
    %495 = vmatprep.subr.bf16.mxu0 0
    %496 = vmatpush1.bf16.msra.mxu0 0
    %497 = vmatprep.subr.bf16.mxu0 0
    %498 = vmatpush1.bf16.msra.mxu0 0
    %499 = vmatprep.subr.bf16.mxu0 0
    %500 = vmatpush1.bf16.msra.mxu0 0
    %501 = vmatprep.subr.bf16.mxu0 0
    %502 = vmatpush1.bf16.msra.mxu0 0
    %503 = vmatprep.mubr.bf16.mxu0 0
    %504 = vmatmul.mubr.bf16.gmra.mrb[0].mxu0 %v469
    %v505 = vpop.f32.mrb[0].mxu0
    %v506 = vadd.f32 0.0, %v505
    %v507 = vpop.f32.mrb[0].mxu0
    %v508 = vadd.f32 0.0, %v507
    %v509 = vpop.f32.mrb[0].mxu0
    %v510 = vpop.f32.mrb[0].mxu0
    %511 = vdwg.mxu0
    %v512 = vadd.f32 %v465, %v506
    %v513 = vadd.f32 %v466, %v508
    %v514 = vxor.u32 %v512, 2147483648
    %v515 = vxor.u32 %v513, 2147483648
    %v516 = vmul.f32 %v514, 1.442695
    %v517 = vpow.pop %v516
    %v518 = vmul.f32 %v515, 1.442695
    %v519 = vpow.pop %v518
    %v520 = vadd.f32 %v517, 1.0
    %v521 = vadd.f32 %v519, 1.0
    %v522 = vrcp.pop %v520
    %v523 = vmul.f32 1.0, %v522
    %v524 = vrcp.pop %v521
    %v525 = vmul.f32 1.0, %v524
    %v526 = vtanh.pop %v513
    %v527 = vmul.f32 %v523, %v457
    %529 = vrot.lane.b32.xlu0 %v526, 64
    %v530 = vpop.permute.xlu0 %529
    %v532 = vmul.f32 %v523, %v530
    %534 = vrot.lane.b32.xlu0 %v532, 64
    %v535 = vpop.permute.xlu0 %534
    %v537 = vadd.f32 %v527, %v535
    %v538 = vtanh.pop %v537
    %540 = vrot.lane.b32.xlu0 %v538, 64
    %v541 = vpop.permute.xlu0 %540
    %v543 = vmul.f32 %v525, %v541
    %s544 = scalar_lea.vmem [#allocation2], 48
    %v545 = vld [vmem:[%s544] sm:$0xff]
    %v546 = vld [vmem:[%s544 + $0x8] sm:$0xff]
    %v547 = vpack.c.bf16 %v543, %v543
    %v549 = vsel %vm303, %v547, 0
    %551 = vmatprep.subr.bf16.mxu0 %v288
    %552 = vmatpush1.bf16.msra.mxu0 %v287
    %553 = vmatprep.subr.bf16.mxu0 %v290
    %554 = vmatpush1.bf16.msra.mxu0 %v289
    %555 = vmatprep.subr.bf16.mxu0 %v292
    %556 = vmatpush1.bf16.msra.mxu0 %v291
    %557 = vmatprep.subr.bf16.mxu0 %v294
    %558 = vmatpush1.bf16.msra.mxu0 %v293
    %559 = vmatprep.subr.bf16.mxu0 0
    %560 = vmatpush1.bf16.msra.mxu0 0
    %561 = vmatprep.subr.bf16.mxu0 0
    %562 = vmatpush1.bf16.msra.mxu0 0
    %563 = vmatprep.subr.bf16.mxu0 0
    %564 = vmatpush1.bf16.msra.mxu0 0
    %565 = vmatprep.subr.bf16.mxu0 0
    %566 = vmatpush1.bf16.msra.mxu0 0
    %567 = vmatprep.subr.bf16.mxu0 0
    %568 = vmatpush1.bf16.msra.mxu0 0
    %569 = vmatprep.subr.bf16.mxu0 0
    %570 = vmatpush1.bf16.msra.mxu0 0
    %571 = vmatprep.subr.bf16.mxu0 0
    %572 = vmatpush1.bf16.msra.mxu0 0
    %573 = vmatprep.subr.bf16.mxu0 0
    %574 = vmatpush1.bf16.msra.mxu0 0
    %575 = vmatprep.subr.bf16.mxu0 0
    %576 = vmatpush1.bf16.msra.mxu0 0
    %577 = vmatprep.subr.bf16.mxu0 0
    %578 = vmatpush1.bf16.msra.mxu0 0
    %579 = vmatprep.subr.bf16.mxu0 0
    %580 = vmatpush1.bf16.msra.mxu0 0
    %581 = vmatprep.subr.bf16.mxu0 0
    %582 = vmatpush1.bf16.msra.mxu0 0
    %583 = vmatprep.mubr.bf16.mxu0 0
    %584 = vmatmul.mubr.bf16.gmra.mrb[0].mxu0 %v549
    %v585 = vpop.f32.mrb[0].mxu0
    %v586 = vadd.f32 0.0, %v585
    %v587 = vpop.f32.mrb[0].mxu0
    %v588 = vadd.f32 0.0, %v587
    %v589 = vpop.f32.mrb[0].mxu0
    %v590 = vpop.f32.mrb[0].mxu0
    %591 = vdwg.mxu0
    %v592 = vadd.f32 %v545, %v586
    %v593 = vadd.f32 %v546, %v588
    %v594 = vxor.u32 %v592, 2147483648
    %v595 = vxor.u32 %v593, 2147483648
    %v596 = vmul.f32 %v594, 1.442695
    %v597 = vpow.pop %v596
    %v598 = vmul.f32 %v595, 1.442695
    %v599 = vpow.pop %v598
    %v600 = vadd.f32 %v597, 1.0
    %v601 = vadd.f32 %v599, 1.0
    %v602 = vrcp.pop %v600
    %v603 = vmul.f32 1.0, %v602
    %v604 = vrcp.pop %v601
    %v605 = vmul.f32 1.0, %v604
    %v606 = vtanh.pop %v593
    %v607 = vmul.f32 %v603, %v537
    %609 = vrot.lane.b32.xlu0 %v606, 64
    %v610 = vpop.permute.xlu0 %609
    %v612 = vmul.f32 %v603, %v610
    %614 = vrot.lane.b32.xlu0 %v612, 64
    %v615 = vpop.permute.xlu0 %614
    %v617 = vadd.f32 %v607, %v615
    %v618 = vtanh.pop %v617
    %620 = vrot.lane.b32.xlu0 %v618, 64
    %v621 = vpop.permute.xlu0 %620
    %v623 = vmul.f32 %v605, %v621
    %s624 = scalar_lea.vmem [#allocation2], 64
    %v625 = vld [vmem:[%s624] sm:$0xff]
    %v626 = vld [vmem:[%s624 + $0x8] sm:$0xff]
    %v627 = vpack.c.bf16 %v623, %v623
    %v629 = vsel %vm303, %v627, 0
    %631 = vmatprep.subr.bf16.mxu0 %v288
    %632 = vmatpush1.bf16.msra.mxu0 %v287
    %633 = vmatprep.subr.bf16.mxu0 %v290
    %634 = vmatpush1.bf16.msra.mxu0 %v289
    %635 = vmatprep.subr.bf16.mxu0 %v292
    %636 = vmatpush1.bf16.msra.mxu0 %v291
    %637 = vmatprep.subr.bf16.mxu0 %v294
    %638 = vmatpush1.bf16.msra.mxu0 %v293
    %639 = vmatprep.subr.bf16.mxu0 0
    %640 = vmatpush1.bf16.msra.mxu0 0
    %641 = vmatprep.subr.bf16.mxu0 0
    %642 = vmatpush1.bf16.msra.mxu0 0
    %643 = vmatprep.subr.bf16.mxu0 0
    %644 = vmatpush1.bf16.msra.mxu0 0
    %645 = vmatprep.subr.bf16.mxu0 0
    %646 = vmatpush1.bf16.msra.mxu0 0
    %647 = vmatprep.subr.bf16.mxu0 0
    %648 = vmatpush1.bf16.msra.mxu0 0
    %649 = vmatprep.subr.bf16.mxu0 0
    %650 = vmatpush1.bf16.msra.mxu0 0
    %651 = vmatprep.subr.bf16.mxu0 0
    %652 = vmatpush1.bf16.msra.mxu0 0
    %653 = vmatprep.subr.bf16.mxu0 0
    %654 = vmatpush1.bf16.msra.mxu0 0
    %655 = vmatprep.subr.bf16.mxu0 0
    %656 = vmatpush1.bf16.msra.mxu0 0
    %657 = vmatprep.subr.bf16.mxu0 0
    %658 = vmatpush1.bf16.msra.mxu0 0
    %659 = vmatprep.subr.bf16.mxu0 0
    %660 = vmatpush1.bf16.msra.mxu0 0
    %661 = vmatprep.subr.bf16.mxu0 0
    %662 = vmatpush1.bf16.msra.mxu0 0
    %663 = vmatprep.mubr.bf16.mxu0 0
    %664 = vmatmul.mubr.bf16.gmra.mrb[0].mxu0 %v629
    %v665 = vpop.f32.mrb[0].mxu0
    %v666 = vadd.f32 0.0, %v665
    %v667 = vpop.f32.mrb[0].mxu0
    %v668 = vadd.f32 0.0, %v667
    %v669 = vpop.f32.mrb[0].mxu0
    %v670 = vpop.f32.mrb[0].mxu0
    %671 = vdwg.mxu0
    %v672 = vadd.f32 %v625, %v666
    %v673 = vadd.f32 %v626, %v668
    %v674 = vxor.u32 %v672, 2147483648
    %v675 = vxor.u32 %v673, 2147483648
    %v676 = vmul.f32 %v674, 1.442695
    %v677 = vpow.pop %v676
    %v678 = vmul.f32 %v675, 1.442695
    %v679 = vpow.pop %v678
    %v680 = vadd.f32 %v677, 1.0
    %v681 = vadd.f32 %v679, 1.0
    %v682 = vrcp.pop %v680
    %v683 = vmul.f32 1.0, %v682
    %v684 = vrcp.pop %v681
    %v685 = vmul.f32 1.0, %v684
    %v686 = vtanh.pop %v673
    %v687 = vmul.f32 %v683, %v617
    %689 = vrot.lane.b32.xlu0 %v686, 64
    %v690 = vpop.permute.xlu0 %689
    %v692 = vmul.f32 %v683, %v690
    %694 = vrot.lane.b32.xlu0 %v692, 64
    %v695 = vpop.permute.xlu0 %694
    %v697 = vadd.f32 %v687, %v695
    %v698 = vtanh.pop %v697
    %700 = vrot.lane.b32.xlu0 %v698, 64
    %v701 = vpop.permute.xlu0 %700
    %v703 = vmul.f32 %v685, %v701
    %s704 = scalar_lea.vmem [#allocation2], 80
    %v705 = vld [vmem:[%s704] sm:$0xff]
    %v706 = vld [vmem:[%s704 + $0x8] sm:$0xff]
    %v707 = vpack.c.bf16 %v703, %v703
    %v709 = vsel %vm303, %v707, 0
    %711 = vmatprep.subr.bf16.mxu0 %v288
    %712 = vmatpush1.bf16.msra.mxu0 %v287
    %713 = vmatprep.subr.bf16.mxu0 %v290
    %714 = vmatpush1.bf16.msra.mxu0 %v289
    %715 = vmatprep.subr.bf16.mxu0 %v292
    %716 = vmatpush1.bf16.msra.mxu0 %v291
    %717 = vmatprep.subr.bf16.mxu0 %v294
    %718 = vmatpush1.bf16.msra.mxu0 %v293
    %719 = vmatprep.subr.bf16.mxu0 0
    %720 = vmatpush1.bf16.msra.mxu0 0
    %721 = vmatprep.subr.bf16.mxu0 0
    %722 = vmatpush1.bf16.msra.mxu0 0
    %723 = vmatprep.subr.bf16.mxu0 0
    %724 = vmatpush1.bf16.msra.mxu0 0
    %725 = vmatprep.subr.bf16.mxu0 0
    %726 = vmatpush1.bf16.msra.mxu0 0
    %727 = vmatprep.subr.bf16.mxu0 0
    %728 = vmatpush1.bf16.msra.mxu0 0
    %729 = vmatprep.subr.bf16.mxu0 0
    %730 = vmatpush1.bf16.msra.mxu0 0
    %731 = vmatprep.subr.bf16.mxu0 0
    %732 = vmatpush1.bf16.msra.mxu0 0
    %733 = vmatprep.subr.bf16.mxu0 0
    %734 = vmatpush1.bf16.msra.mxu0 0
    %735 = vmatprep.subr.bf16.mxu0 0
    %736 = vmatpush1.bf16.msra.mxu0 0
    %737 = vmatprep.subr.bf16.mxu0 0
    %738 = vmatpush1.bf16.msra.mxu0 0
    %739 = vmatprep.subr.bf16.mxu0 0
    %740 = vmatpush1.bf16.msra.mxu0 0
    %741 = vmatprep.subr.bf16.mxu0 0
    %742 = vmatpush1.bf16.msra.mxu0 0
    %743 = vmatprep.mubr.bf16.mxu0 0
    %744 = vmatmul.mubr.bf16.gmra.mrb[0].mxu0 %v709
    %v745 = vpop.f32.mrb[0].mxu0
    %v746 = vadd.f32 0.0, %v745
    %v747 = vpop.f32.mrb[0].mxu0
    %v748 = vadd.f32 0.0, %v747
    %v749 = vpop.f32.mrb[0].mxu0
    %v750 = vpop.f32.mrb[0].mxu0
    %751 = vdwg.mxu0
    %v752 = vadd.f32 %v705, %v746
    %v753 = vadd.f32 %v706, %v748
    %v754 = vxor.u32 %v752, 2147483648
    %v755 = vxor.u32 %v753, 2147483648
    %v756 = vmul.f32 %v754, 1.442695
    %v757 = vpow.pop %v756
    %v758 = vmul.f32 %v755, 1.442695
    %v759 = vpow.pop %v758
    %v760 = vadd.f32 %v757, 1.0
    %v761 = vadd.f32 %v759, 1.0
    %v762 = vrcp.pop %v760
    %v763 = vmul.f32 1.0, %v762
    %v764 = vrcp.pop %v761
    %v765 = vmul.f32 1.0, %v764
    %v766 = vtanh.pop %v753
    %v767 = vmul.f32 %v763, %v697
    %769 = vrot.lane.b32.xlu0 %v766, 64
    %v770 = vpop.permute.xlu0 %769
    %v772 = vmul.f32 %v763, %v770
    %774 = vrot.lane.b32.xlu0 %v772, 64
    %v775 = vpop.permute.xlu0 %774
    %v777 = vadd.f32 %v767, %v775
    %v778 = vtanh.pop %v777
    %780 = vrot.lane.b32.xlu0 %v778, 64
    %v781 = vpop.permute.xlu0 %780
    %v783 = vmul.f32 %v765, %v781
    %s784 = scalar_lea.vmem [#allocation2], 96
    %v785 = vld [vmem:[%s784] sm:$0xff]
    %v786 = vld [vmem:[%s784 + $0x8] sm:$0xff]
    %v787 = vpack.c.bf16 %v783, %v783
    %v789 = vsel %vm303, %v787, 0
    %791 = vmatprep.subr.bf16.mxu0 %v288
    %792 = vmatpush1.bf16.msra.mxu0 %v287
    %793 = vmatprep.subr.bf16.mxu0 %v290
    %794 = vmatpush1.bf16.msra.mxu0 %v289
    %795 = vmatprep.subr.bf16.mxu0 %v292
    %796 = vmatpush1.bf16.msra.mxu0 %v291
    %797 = vmatprep.subr.bf16.mxu0 %v294
    %798 = vmatpush1.bf16.msra.mxu0 %v293
    %799 = vmatprep.subr.bf16.mxu0 0
    %800 = vmatpush1.bf16.msra.mxu0 0
    %801 = vmatprep.subr.bf16.mxu0 0
    %802 = vmatpush1.bf16.msra.mxu0 0
    %803 = vmatprep.subr.bf16.mxu0 0
    %804 = vmatpush1.bf16.msra.mxu0 0
    %805 = vmatprep.subr.bf16.mxu0 0
    %806 = vmatpush1.bf16.msra.mxu0 0
    %807 = vmatprep.subr.bf16.mxu0 0
    %808 = vmatpush1.bf16.msra.mxu0 0
    %809 = vmatprep.subr.bf16.mxu0 0
    %810 = vmatpush1.bf16.msra.mxu0 0
    %811 = vmatprep.subr.bf16.mxu0 0
    %812 = vmatpush1.bf16.msra.mxu0 0
    %813 = vmatprep.subr.bf16.mxu0 0
    %814 = vmatpush1.bf16.msra.mxu0 0
    %815 = vmatprep.subr.bf16.mxu0 0
    %816 = vmatpush1.bf16.msra.mxu0 0
    %817 = vmatprep.subr.bf16.mxu0 0
    %818 = vmatpush1.bf16.msra.mxu0 0
    %819 = vmatprep.subr.bf16.mxu0 0
    %820 = vmatpush1.bf16.msra.mxu0 0
    %821 = vmatprep.subr.bf16.mxu0 0
    %822 = vmatpush1.bf16.msra.mxu0 0
    %823 = vmatprep.mubr.bf16.mxu0 0
    %824 = vmatmul.mubr.bf16.gmra.mrb[0].mxu0 %v789
    %v825 = vpop.f32.mrb[0].mxu0
    %v826 = vadd.f32 0.0, %v825
    %v827 = vpop.f32.mrb[0].mxu0
    %v828 = vadd.f32 0.0, %v827
    %v829 = vpop.f32.mrb[0].mxu0
    %v830 = vpop.f32.mrb[0].mxu0
    %831 = vdwg.mxu0
    %v832 = vadd.f32 %v785, %v826
    %v833 = vadd.f32 %v786, %v828
    %v834 = vxor.u32 %v832, 2147483648
    %v835 = vxor.u32 %v833, 2147483648
    %v836 = vmul.f32 %v834, 1.442695
    %v837 = vpow.pop %v836
    %v838 = vmul.f32 %v835, 1.442695
    %v839 = vpow.pop %v838
    %v840 = vadd.f32 %v837, 1.0
    %v841 = vadd.f32 %v839, 1.0
    %v842 = vrcp.pop %v840
    %v843 = vmul.f32 1.0, %v842
    %v844 = vrcp.pop %v841
    %v845 = vmul.f32 1.0, %v844
    %v846 = vtanh.pop %v833
    %v847 = vmul.f32 %v843, %v777
    %849 = vrot.lane.b32.xlu0 %v846, 64
    %v850 = vpop.permute.xlu0 %849
    %v852 = vmul.f32 %v843, %v850
    %854 = vrot.lane.b32.xlu0 %v852, 64
    %v855 = vpop.permute.xlu0 %854
    %v857 = vadd.f32 %v847, %v855
    %v858 = vtanh.pop %v857
    %860 = vrot.lane.b32.xlu0 %v858, 64
    %v861 = vpop.permute.xlu0 %860
    %v863 = vmul.f32 %v845, %v861
    %s864 = scalar_lea.vmem [#allocation2], 112
    %v865 = vld [vmem:[%s864] sm:$0xff]
    %v866 = vld [vmem:[%s864 + $0x8] sm:$0xff]
    %v867 = vpack.c.bf16 %v863, %v863
    %v869 = vsel %vm303, %v867, 0
    %871 = vmatprep.subr.bf16.mxu0 %v288
    %872 = vmatpush1.bf16.msra.mxu0 %v287
    %873 = vmatprep.subr.bf16.mxu0 %v290
    %874 = vmatpush1.bf16.msra.mxu0 %v289
    %875 = vmatprep.subr.bf16.mxu0 %v292
    %876 = vmatpush1.bf16.msra.mxu0 %v291
    %877 = vmatprep.subr.bf16.mxu0 %v294
    %878 = vmatpush1.bf16.msra.mxu0 %v293
    %879 = vmatprep.subr.bf16.mxu0 0
    %880 = vmatpush1.bf16.msra.mxu0 0
    %881 = vmatprep.subr.bf16.mxu0 0
    %882 = vmatpush1.bf16.msra.mxu0 0
    %883 = vmatprep.subr.bf16.mxu0 0
    %884 = vmatpush1.bf16.msra.mxu0 0
    %885 = vmatprep.subr.bf16.mxu0 0
    %886 = vmatpush1.bf16.msra.mxu0 0
    %887 = vmatprep.subr.bf16.mxu0 0
    %888 = vmatpush1.bf16.msra.mxu0 0
    %889 = vmatprep.subr.bf16.mxu0 0
    %890 = vmatpush1.bf16.msra.mxu0 0
    %891 = vmatprep.subr.bf16.mxu0 0
    %892 = vmatpush1.bf16.msra.mxu0 0
    %893 = vmatprep.subr.bf16.mxu0 0
    %894 = vmatpush1.bf16.msra.mxu0 0
    %895 = vmatprep.subr.bf16.mxu0 0
    %896 = vmatpush1.bf16.msra.mxu0 0
    %897 = vmatprep.subr.bf16.mxu0 0
    %898 = vmatpush1.bf16.msra.mxu0 0
    %899 = vmatprep.subr.bf16.mxu0 0
    %900 = vmatpush1.bf16.msra.mxu0 0
    %901 = vmatprep.subr.bf16.mxu0 0
    %902 = vmatpush1.bf16.msra.mxu0 0
    %903 = vmatprep.mubr.bf16.mxu0 0
    %904 = vmatmul.mubr.bf16.gmra.mrb[0].mxu0 %v869
    %v905 = vpop.f32.mrb[0].mxu0
    %v906 = vadd.f32 0.0, %v905
    %v907 = vpop.f32.mrb[0].mxu0
    %v908 = vadd.f32 0.0, %v907
    %v909 = vpop.f32.mrb[0].mxu0
    %v910 = vpop.f32.mrb[0].mxu0
    %911 = vdwg.mxu0
    %v912 = vadd.f32 %v865, %v906
    %v913 = vadd.f32 %v866, %v908
    %v914 = vxor.u32 %v912, 2147483648
    %v915 = vxor.u32 %v913, 2147483648
    %v916 = vmul.f32 %v914, 1.442695
    %v917 = vpow.pop %v916
    %v918 = vmul.f32 %v915, 1.442695
    %v919 = vpow.pop %v918
    %v920 = vadd.f32 %v917, 1.0
    %v921 = vadd.f32 %v919, 1.0
    %v922 = vrcp.pop %v920
    %v923 = vmul.f32 1.0, %v922
    %v924 = vrcp.pop %v921
    %v925 = vmul.f32 1.0, %v924
    %v926 = vtanh.pop %v913
    %v927 = vmul.f32 %v923, %v857
    %929 = vrot.lane.b32.xlu0 %v926, 64
    %v930 = vpop.permute.xlu0 %929
    %v932 = vmul.f32 %v923, %v930
    %934 = vrot.lane.b32.xlu0 %v932, 64
    %v935 = vpop.permute.xlu0 %934
    %v937 = vadd.f32 %v927, %v935
    %v938 = vtanh.pop %v937
    %940 = vrot.lane.b32.xlu0 %v938, 64
    %v941 = vpop.permute.xlu0 %940
    %v943 = vmul.f32 %v925, %v941
    %944 = vst.msk [vmem:[#allocation3] sm:$0xff] %vm303, %v943
    %946 = vrot.lane.b32.xlu0 %v937, 64
    %v947 = vpop.permute.xlu0 %946
    %949 = vst.msk [vmem:[#allocation4] sm:$0xff] %vm303, %v947
    // Predicated region
    $region38: #{tpu_custom_call.1} parent=1 // pred_check
      %p950 = pneg %p33
    $region39: #{tpu_custom_call.1} parent=1 // pred_check_branch
      %952 = sbr.rel (%p950) target = $region41
    $region40: #{tpu_custom_call.1} parent=1 // pred_region
      %v953 = vpack.c.bf16 %v943, %v943
      %v954 = vld [vmem:[%s4] sm:$0xf]
      %v955 = vld [vmem:[%s4 + $0x4] sm:$0xf]
      %v956 = vld [vmem:[%s4 + $0x8] sm:$0xf]
      %v957 = vld [vmem:[%s4 + $0xc] sm:$0xf]
      %v958 = vld [vmem:[%s4 + $0x10] sm:$0xf]
      %v959 = vld [vmem:[%s4 + $0x14] sm:$0xf]
      %v960 = vld [vmem:[%s4 + $0x18] sm:$0xf]
      %v961 = vld [vmem:[%s4 + $0x1c] sm:$0xf]
      %v962 = vld [vmem:[%s5] sm:$0x1]
      %v964 = vlaneseq
      %v965 = vshrl.u32 %v964, 7
      %v966 = vsub.s32 0, %v965
      %v967 = vrot.slane %v962, %v966
      %v977 = vunpack.c.l.b16 %v954
      %v978 = vunpack.c.l.b16 %v955
      %v979 = vunpack.c.l.b16 %v956
      %v980 = vunpack.c.l.b16 %v957
      %v981 = vunpack.c.l.b16 %v958
      %v982 = vunpack.c.l.b16 %v959
      %v983 = vunpack.c.l.b16 %v960
      %v984 = vunpack.c.l.b16 %v961
      %v985 = vpack.c.b16 %v978, %v977
      %v986 = vpack.c.b16 %v980, %v979
      %v987 = vpack.c.b16 %v982, %v981
      %v988 = vpack.c.b16 %v984, %v983
      %v994 = vsel %vm303, %v953, 0
      %996 = vmatprep.subr.bf16.mxu0 0
      %997 = vmatpush1.bf16.msra.mxu0 %v985
      %998 = vmatprep.subr.bf16.mxu0 0
      %999 = vmatpush1.bf16.msra.mxu0 %v986
      %1000 = vmatprep.subr.bf16.mxu0 0
      %1001 = vmatpush1.bf16.msra.mxu0 %v987
      %1002 = vmatprep.subr.bf16.mxu0 0
      %1003 = vmatpush1.bf16.msra.mxu0 %v988
      %1004 = vmatprep.subr.bf16.mxu0 0
      %1005 = vmatpush1.bf16.msra.mxu0 0
      %1006 = vmatprep.subr.bf16.mxu0 0
      %1007 = vmatpush1.bf16.msra.mxu0 0
      %1008 = vmatprep.subr.bf16.mxu0 0
      %1009 = vmatpush1.bf16.msra.mxu0 0
      %1010 = vmatprep.subr.bf16.mxu0 0
      %1011 = vmatpush1.bf16.msra.mxu0 0
      %1012 = vmatprep.subr.bf16.mxu0 0
      %1013 = vmatpush1.bf16.msra.mxu0 0
      %1014 = vmatprep.subr.bf16.mxu0 0
      %1015 = vmatpush1.bf16.msra.mxu0 0
      %1016 = vmatprep.subr.bf16.mxu0 0
      %1017 = vmatpush1.bf16.msra.mxu0 0
      %1018 = vmatprep.subr.bf16.mxu0 0
      %1019 = vmatpush1.bf16.msra.mxu0 0
      %1020 = vmatprep.subr.bf16.mxu0 0
      %1021 = vmatpush1.bf16.msra.mxu0 0
      %1022 = vmatprep.subr.bf16.mxu0 0
      %1023 = vmatpush1.bf16.msra.mxu0 0
      %1024 = vmatprep.subr.bf16.mxu0 0
      %1025 = vmatpush1.bf16.msra.mxu0 0
      %1026 = vmatprep.subr.bf16.mxu0 0
      %1027 = vmatpush1.bf16.msra.mxu0 0
      %1028 = vmatprep.mubr.bf16.mxu0 0
      %1029 = vmatmul.mubr.bf16.gmra.mrb[0].mxu0 %v994
      %v1030 = vpop.f32.mrb[0].mxu0
      %v1031 = vadd.f32 %v967, %v1030
      %v1032 = vpop.f32.mrb[0].mxu0
      %v1033 = vpop.f32.mrb[0].mxu0
      %v1034 = vpop.f32.mrb[0].mxu0
      %1035 = vdwg.mxu0
      %v1036 = vmax.f32 %v1031, 0.0
      %v1037 = vld [vmem:[%s6] sm:$0x1]
      %v1039 = vlaneseq
      %v1040 = vshrl.u32 %v1039, 7
      %v1041 = vsub.s32 0, %v1040
      %v1042 = vrot.slane %v1037, %v1041
      %v1044 = vmul.f32 %v1036, %v1042
      %vm1045 = vcmask 261120
      %v1046 = vsel %vm1045, %v1044, 0.0
      %1047 = vadd.xlane.f32.xlu0 %v1046
      %v1048 = vpop.xlane.xlu0 %1047
      %v1049 = vld [vmem:[#allocation5] sm:$0x1]
      %v1051 = vlaneseq
      %v1052 = vshrl.u32 %v1051, 7
      %v1053 = vsub.s32 0, %v1052
      %v1054 = vrot.slane %v1049, %v1053
      %v1056 = vadd.f32 %v1048, %v1054
      %1058 = vset.pattern.permute.xlu0 0
      %1059 = vperm.xlu0 %1058, %v1056
      %v1060 = vpop.permute.xlu0 %1059
      %1062 = vst [vmem:[#allocation6] sm:$0xff] %v1060
    $region41: #{tpu_custom_call.1} parent=1 // pred_fallthru
      _
    // Predicated region
    $region42: #{tpu_custom_call.1} parent=1 // pred_check
      _
    $region43: #{tpu_custom_call.1} parent=1 // pred_check_branch
      %1064 = sbr.rel (0) target = $region45
    $region44: #{tpu_custom_call.1} parent=1 // pred_region
      %s1066 = ssub.s32 128, 128
      %1067 = vsyncadd [#allocation7], %s1066
      %s1069 = sshll.u32 [#allocation6], 4
      %s1070 = int_to_ptr.vmem [resolvable:$true] %s1069
      %1072 = dma.vmem_to_hbm [thread:$0]  %s1070, 128, %s8, [#allocation7]
    $region45: #{tpu_custom_call.1} parent=1 // pred_fallthru
      _
    // Predicated region
    $region46: #{tpu_custom_call.1} parent=1 // pred_check
      _
    $region47: #{tpu_custom_call.1} parent=1 // pred_check_branch
      %1074 = sbr.rel (0) target = $region49
    $region48: #{tpu_custom_call.1} parent=1 // pred_region
      %1075 = dma.done [#allocation7], 128
    $region49: #{tpu_custom_call.1} parent=1 // pred_fallthru
      _
    %1076 = vsyncpa [#allocation7], 1

</llo_original>
